<compile_context>
chip_gen: v7x
topology: tpu7x:2x2x1
jax: 0.10.0
libtpu: 0.0.40
codegen_flags: <defaults>
</compile_context>

<pallas_src>
import math

import numpy as np
import jax
import jax.numpy as jnp
from jax import lax
from jax.experimental import pallas as pl
from jax.experimental.pallas import tpu as pltpu

_VMEM_LIMIT = 32 * 1024 * 1024   # explicit scoped-VMEM budget; safe on v5e/v6e/v7x


# ---------------------------------------------------------------------------
# helpers
# ---------------------------------------------------------------------------
def _pad_to(x, axis, multiple):
    size = x.shape[axis]
    pad = (-size) % multiple
    if pad == 0:
        return x
    widths = [(0, 0)] * x.ndim
    widths[axis] = (0, pad)
    return jnp.pad(x, widths)


def _pick_tile(dim, target, align):
    """Largest `align`-multiple tile <= target that divides dim, else full dim.

    All lane dims fed to kernels here are padded to multiples of 128, so the
    full-dim fallback only triggers for small dims (<= target) where the block
    equals the whole axis -- it never silently creates an oversized block.
    """
    if dim <= target:
        return dim
    t = (target // align) * align
    while t >= align:
        if dim % t == 0:
            return t
        t -= align
    return dim


def _scatter_mats(num_nodes):
    """Static 0/1 matrices for triu gather / symmetric scatter / degree.

    G    (N*N, Ep): v = adj_flat @ G         (edge gather, exact pick)
    Sadj (Ep, N*N): adj_flat = e @ Sadj      (symmetric scatter, zero diagonal)
    Sdeg (Ep, N)  : deg = e @ Sdeg           (each edge hits its two endpoints)
    Padded edge lanes (>= E) have all-zero rows/cols, so the sigmoid's 0.5 in
    padded lanes can never leak into the adjacency or the degrees.

    TODO(synk): O(N^4) memory; for large num_nodes replace with a
    PrefetchScalarGridSpec gather/scatter kernel (fine for this module, N=16).
    """
    iu0, iu1 = np.triu_indices(num_nodes, 1)
    E = iu0.shape[0]
    Ep = ((E + 127) // 128) * 128
    NN = num_nodes * num_nodes
    ke = np.arange(E)
    g = np.zeros((NN, Ep), np.float32)
    g[iu0 * num_nodes + iu1, ke] = 1.0
    sadj = np.zeros((Ep, NN), np.float32)
    sadj[ke, iu0 * num_nodes + iu1] = 1.0
    sadj[ke, iu1 * num_nodes + iu0] = 1.0
    sdeg = np.zeros((Ep, num_nodes), np.float32)
    sdeg[ke, iu0] = 1.0
    sdeg[ke, iu1] = 1.0
    return jnp.asarray(g), jnp.asarray(sadj), jnp.asarray(sdeg)


# ---------------------------------------------------------------------------
# Kernel 1: fused  triu-gather -> GraphEmbedding MLP -> symmetric adjacency
#           (bf16, flattened) + degree + D^-1/2,  one pallas_call per layer.
# ---------------------------------------------------------------------------
def _make_embed_adj_kernel(n_mlp):
    def kernel(*refs):
        adjflat_ref = refs[0]
        g_ref = refs[1]
        wb = refs[2:2 + 2 * n_mlp]
        sadj_ref = refs[2 + 2 * n_mlp]
        sdeg_ref = refs[3 + 2 * n_mlp]
        adj_ref = refs[4 + 2 * n_mlp]
        d_ref = refs[5 + 2 * n_mlp]

        # triu gather as an exact 0/1 matmul: v[b,k] = adj[b, iu0[k], iu1[k]]
        h = jnp.dot(adjflat_ref[...], g_ref[...],
                    preferred_element_type=jnp.float32)

        # GraphEmbedding MLP (bf16 MXU feeds, f32 accumulation)
        for l in range(n_mlp):
            w_ref, b_ref = wb[2 * l], wb[2 * l + 1]
            h = jnp.dot(h.astype(jnp.bfloat16), w_ref[...].astype(jnp.bfloat16),
                        preferred_element_type=jnp.float32) + b_ref[...]
            h = jax.nn.sigmoid(h) if l == n_mlp - 1 else jnp.maximum(h, 0.0)

        # symmetric scatter (flattened adjacency, emitted straight in bf16) and
        # degree / D^-1/2.  Padded edge lanes hit all-zero rows of Sadj/Sdeg.
        adj_ref[...] = jnp.dot(h, sadj_ref[...],
                               preferred_element_type=jnp.float32
                               ).astype(adj_ref.dtype)
        deg = jnp.dot(h, sdeg_ref[...], preferred_element_type=jnp.float32)
        d_ref[...] = jnp.where(deg > 0.0, lax.rsqrt(deg), 0.0)

    return kernel


def embed_adjacency(adj_flat, mlp_padded, scatter_mats):
    """Returns (adj_bf16 (B,N,N), d (B,N) f32) for one GraphConvolution layer."""
    g, sadj, sdeg = scatter_mats
    B, NN = adj_flat.shape
    N = sdeg.shape[1]

    ins = [adj_flat, g]
    for (w, b) in mlp_padded:
        ins.append(w)
        ins.append(b)
    ins += [sadj, sdeg]

    def full_spec(a):
        nd = a.ndim
        return pl.BlockSpec(a.shape, lambda i, _nd=nd: (0,) * _nd)

    adj_bf16, d = pl.pallas_call(
        _make_embed_adj_kernel(len(mlp_padded)),
        out_shape=(jax.ShapeDtypeStruct((B, NN), jnp.bfloat16),
                   jax.ShapeDtypeStruct((B, N), jnp.float32)),
        grid=(1,),
        in_specs=[full_spec(a) for a in ins],
        out_specs=(pl.BlockSpec((B, NN), lambda i: (0, 0)),
                   pl.BlockSpec((B, N), lambda i: (0, 0))),
        compiler_params=pltpu.CompilerParams(
            dimension_semantics=("arbitrary",),
            vmem_limit_bytes=_VMEM_LIMIT),
    )(*ins)
    return adj_bf16.reshape(B, N, N), d


# ---------------------------------------------------------------------------
# Kernel 2: generic tiled  act(x @ W + b)   (bf16 MXU feeds, f32 accumulate)
#   grid = (M//TM, N//TN, K//TK), reduction axis last, f32 accumulator scratch.
#   Used for: the hoisted x@W support matmul and the final encode Linear.
# ---------------------------------------------------------------------------
def _make_matmul_kernel(activation):
    def kernel(x_ref, w_ref, b_ref, o_ref, acc_ref):
        k = pl.program_id(2)

        @pl.when(k == 0)
        def _():
            acc_ref[...] = jnp.zeros_like(acc_ref)

        acc_ref[...] += jnp.dot(x_ref[...].astype(jnp.bfloat16),
                                w_ref[...].astype(jnp.bfloat16),
                                preferred_element_type=jnp.float32)

        @pl.when(k == pl.num_programs(2) - 1)
        def _():
            y = acc_ref[...] + b_ref[...]
            if activation == "relu":
                y = jnp.maximum(y, 0.0)
            o_ref[...] = y.astype(o_ref.dtype)

    return kernel


def matmul_bias_act(x, w, b=None, activation="none"):
    M, K = x.shape
    _, N = w.shape
    if b is None:
        b = jnp.zeros((1, N), jnp.float32)
    b = b.reshape(1, N)

    tm = _pick_tile(M, 512, 16)     # bf16 LHS -> 16-row sublane packs
    tn = _pick_tile(N, 256, 128)
    tk = _pick_tile(K, 512, 128)
    grid = (M // tm, N // tn, K // tk)

    return pl.pallas_call(
        _make_matmul_kernel(activation),
        out_shape=jax.ShapeDtypeStruct((M, N), jnp.float32),
        grid=grid,
        in_specs=[
            pl.BlockSpec((tm, tk), lambda i, j, k: (i, k)),
            pl.BlockSpec((tk, tn), lambda i, j, k: (k, j)),
            pl.BlockSpec((1, tn), lambda i, j, k: (0, j)),
        ],
        out_specs=pl.BlockSpec((tm, tn), lambda i, j, k: (i, j)),
        scratch_shapes=[pltpu.VMEM((tm, tn), jnp.float32)],
        compiler_params=pltpu.CompilerParams(
            dimension_semantics=("parallel", "parallel", "arbitrary"),
            vmem_limit_bytes=_VMEM_LIMIT),
    )(x, w, b)


# ---------------------------------------------------------------------------
# Kernel 3: implicit normalized-Laplacian apply + fused ReLU
#   out = relu(support - d ⊙ (A @ (d ⊙ support)))
#   A arrives already in bf16 (from kernel 1);  s = d ⊙ support is built
#   in-kernel (VPU mul + bf16 cast) so it is never materialized in HBM.
#   grid = (B, N//TM, N//TK), reduction over TK (last, "arbitrary").
# ---------------------------------------------------------------------------
def _lap_relu_kernel(adj_ref, sup_k_ref, d_k_ref, sup_i_ref, d_i_ref, o_ref, acc_ref):
    k = pl.program_id(2)

    @pl.when(k == 0)
    def _():
        acc_ref[...] = jnp.zeros_like(acc_ref)

    s = (d_k_ref[0] * sup_k_ref[0]).astype(jnp.bfloat16)          # (tk, Fp)
    acc_ref[...] += jnp.dot(adj_ref[0], s, preferred_element_type=jnp.float32)

    @pl.when(k == pl.num_programs(2) - 1)
    def _():
        # (I - D^-1/2 A D^-1/2) @ support, then the GCN per-layer relu
        o_ref[0] = jnp.maximum(sup_i_ref[0] - d_i_ref[0] * acc_ref[...], 0.0)


def lap_apply_relu(adj_bf16, support, d):
    B, N, _ = adj_bf16.shape
    Fp = support.shape[-1]
    tm = _pick_tile(N, 512, 16)      # bf16 adjacency tile rows -> 16-sublane packs
    tk = _pick_tile(N, 1024, 128)
    grid = (B, N // tm, N // tk)
    d3 = d.reshape(B, N, 1)

    # TODO(synk): Fp is not tiled (this module keeps Fp <= 128); for large F_out
    # add an Fp grid axis so (tk,Fp)/(tm,Fp) blocks stay inside v7x's 64 MiB VMEM.
    return pl.pallas_call(
        _lap_relu_kernel,
        out_shape=jax.ShapeDtypeStruct((B, N, Fp), jnp.float32),
        grid=grid,
        in_specs=[
            pl.BlockSpec((1, tm, tk), lambda b, i, k: (b, i, k)),   # A (bf16)
            pl.BlockSpec((1, tk, Fp), lambda b, i, k: (b, k, 0)),   # support, k rows
            pl.BlockSpec((1, tk, 1), lambda b, i, k: (b, k, 0)),    # d, k rows
            pl.BlockSpec((1, tm, Fp), lambda b, i, k: (b, i, 0)),   # support, i rows
            pl.BlockSpec((1, tm, 1), lambda b, i, k: (b, i, 0)),    # d, i rows
        ],
        out_specs=pl.BlockSpec((1, tm, Fp), lambda b, i, k: (b, i, 0)),
        scratch_shapes=[pltpu.VMEM((tm, Fp), jnp.float32)],
        compiler_params=pltpu.CompilerParams(
            dimension_semantics=("parallel", "parallel", "arbitrary"),
            vmem_limit_bytes=_VMEM_LIMIT),
    )(adj_bf16, support, d3, support, d3)


# ---------------------------------------------------------------------------
# Full GCN forward
# ---------------------------------------------------------------------------
def gcn_forward(x, adj, params, num_nodes):
    B, N, _ = x.shape
    scatter_mats = _scatter_mats(num_nodes)
    adj_flat = adj.reshape(B, N * N)          # metadata-only reshape

    for layer in params["layers"]:
        # -- pad MLP weights to 128-lane multiples (zero pad; padded edge lanes
        #    of the gathered edge vector are zero and scatter-matrix pad rows
        #    are zero, so the sigmoid's 0.5 in padded lanes never leaks)
        mlp_padded = [( _pad_to(_pad_to(w, 0, 128), 1, 128), _pad_to(b, 1, 128))
                      for (w, b) in layer["mlp"]]

        # -- fused: triu gather + MLP + symmetric scatter + degree + rsqrt;
        #    adjacency comes back already in bf16 (no XLA cast / scatter / sum)
        adj_l, d = embed_adjacency(adj_flat, mlp_padded, scatter_mats)

        # -- support = x @ W, hoisted over batch; F_out padded to 128 lanes and
        #    the padding carried into the next layer (padded cols stay exactly 0)
        Fin = x.shape[-1]
        w_pad = _pad_to(layer["weight"], 1, 128)
        if w_pad.shape[0] < Fin:                       # padded-Fin carried forward
            w_pad = jnp.pad(w_pad, ((0, Fin - w_pad.shape[0]), (0, 0)))
        Fp = w_pad.shape[1]
        support = matmul_bias_act(x.reshape(B * N, Fin), w_pad, None, "none")
        support = support.reshape(B, N, Fp)

        # -- implicit normalized Laplacian + fused relu (s built in-kernel)
        x = lap_apply_relu(adj_l, support, d)
        # TODO(synk): F.dropout is identity in eval mode; training-mode dropout
        # (stateful RNG mask) not implemented.

    # encode layer: re-index w_enc rows to match the 128-padded per-node width
    Fout_last = params["layers"][-1]["weight"].shape[1]
    Fp_last = x.shape[-1]
    enc_dim = params["w_enc"].shape[1]
    enc_pad = ((enc_dim + 127) // 128) * 128
    w3 = params["w_enc"].reshape(num_nodes, Fout_last, enc_dim)
    w3 = jnp.pad(w3, ((0, 0), (0, Fp_last - Fout_last), (0, enc_pad - enc_dim)))
    w_enc_eff = w3.reshape(num_nodes * Fp_last, enc_pad)
    b_enc_eff = _pad_to(params["b_enc"], 1, 128)
    enc = matmul_bias_act(x.reshape(B, num_nodes * Fp_last),
                          w_enc_eff, b_enc_eff, "none")
    return enc[:, :enc_dim]


gcn_forward_jit = jax.jit(gcn_forward, static_argnums=(3,))


# ---------------------------------------------------------------------------
# Pure-JAX f32 reference (mirrors the PyTorch forward) for verification
# ---------------------------------------------------------------------------
def reference_forward(x, adj, params, num_nodes):
    iu0, iu1 = jnp.triu_indices(num_nodes, k=1)
    for layer in params["layers"]:
        v = adj[:, iu0, iu1]
        h = v
        n = len(layer["mlp"])
        for idx, (w, b) in enumerate(layer["mlp"]):
            h = h @ w + b
            h = jax.nn.sigmoid(h) if idx == n - 1 else jnp.maximum(h, 0.0)
        adj_new = jnp.zeros_like(adj)
        adj_new = adj_new.at[:, iu0, iu1].set(h).at[:, iu1, iu0].set(h)
        deg = jnp.sum(adj_new, axis=-1)
        d = jnp.where(deg > 0, lax.rsqrt(deg), 0.0)
        lap = (jnp.eye(num_nodes, dtype=adj.dtype)[None]
               - d[:, :, None] * adj_new * d[:, None, :])
        support = x @ layer["weight"]
        x = jnp.maximum(lap @ support, 0.0)
    B = x.shape[0]
    x = x.reshape(B, -1)
    return x @ params["w_enc"] + params["b_enc"]


# ---------------------------------------------------------------------------
# Parameter init matching the PyTorch shapes (weights stored as (in, out))
# ---------------------------------------------------------------------------
def init_params(key, num_nodes, layer_sizes, hidden_layers, encode_dim):
    E = num_nodes * (num_nodes - 1) // 2
    layers = []
    for i in range(len(layer_sizes) - 1):
        in_dim, out_dim = layer_sizes[i], layer_sizes[i + 1]
        key, kw = jax.random.split(key)
        bound = math.sqrt(1.0 / out_dim)
        weight = jax.random.uniform(kw, (in_dim, out_dim),
                                    minval=-bound, maxval=bound, dtype=jnp.float32)
        mlp = []
        dims = [E] + list(hidden_layers) + [E]
        for j in range(len(dims) - 1):
            key, k1, k2 = jax.random.split(key, 3)
            b = math.sqrt(1.0 / dims[j])
            w = jax.random.uniform(k1, (dims[j], dims[j + 1]),
                                   minval=-b, maxval=b, dtype=jnp.float32)
            bb = jax.random.uniform(k2, (1, dims[j + 1]),
                                    minval=-b, maxval=b, dtype=jnp.float32)
            mlp.append((w, bb))
        layers.append({"weight": weight, "mlp": mlp})

    key, k1, k2 = jax.random.split(key, 3)
    fan_in = layer_sizes[-1] * num_nodes
    b = math.sqrt(1.0 / fan_in)
    w_enc = jax.random.uniform(k1, (fan_in, encode_dim),
                               minval=-b, maxval=b, dtype=jnp.float32)
    b_enc = jax.random.uniform(k2, (1, encode_dim),
                               minval=-b, maxval=b, dtype=jnp.float32)
    return {"layers": layers, "w_enc": w_enc, "b_enc": b_enc}


if __name__ == "__main__":
    B = 2
    NUM_NODES = 16            # GCN default num_nodes
    LAYER_SIZES = [16, 32, 32]
    HIDDEN_LAYERS = [128]     # GraphEmbedding hidden layer sizes
    ENCODE_DIM = 32           # GCN default encode_dim

    key = jax.random.PRNGKey(0)
    kp, kx, ka = jax.random.split(key, 3)

    params = init_params(kp, NUM_NODES, LAYER_SIZES, HIDDEN_LAYERS, ENCODE_DIM)
    x = jax.random.normal(kx, (B, NUM_NODES, LAYER_SIZES[0]), dtype=jnp.float32)
    # symmetric non-negative adjacency with zero diagonal
    a = jax.random.uniform(ka, (B, NUM_NODES, NUM_NODES), dtype=jnp.float32)
    adj = (a + jnp.swapaxes(a, -1, -2)) * 0.5
    adj = adj * (1.0 - jnp.eye(NUM_NODES, dtype=jnp.float32))

    out = gcn_forward_jit(x, adj, params, NUM_NODES)
    out = jax.block_until_ready(out)
    assert out.shape == (B, ENCODE_DIM)

    ref = reference_forward(x, adj, params, NUM_NODES)
    # bf16 MXU feeds (MLP, adjacency, support, encode) vs f32 reference:
    # expected error ~1e-2; compared at a loose tolerance.
    max_diff = float(jnp.max(jnp.abs(out - ref)))
    assert jnp.allclose(out, ref, rtol=5e-2, atol=5e-2), (
        f"mismatch vs reference: max abs diff {max_diff}")

    print("KERNEL_OK")
</pallas_src>

<mosaic_0001>
module attributes {stable_mosaic.version = 11 : i64} {
  func.func @kernel(%arg0: i32, %arg1: memref<2x256xf32, #tpu.memory_space<vmem>>, %arg2: memref<256x128xf32, #tpu.memory_space<vmem>>, %arg3: memref<128x128xf32, #tpu.memory_space<vmem>>, %arg4: memref<1x128xf32, #tpu.memory_space<vmem>>, %arg5: memref<128x128xf32, #tpu.memory_space<vmem>>, %arg6: memref<1x128xf32, #tpu.memory_space<vmem>>, %arg7: memref<128x256xf32, #tpu.memory_space<vmem>>, %arg8: memref<128x16xf32, #tpu.memory_space<vmem>>, %arg9: memref<2x256xbf16, #tpu.memory_space<vmem>>, %arg10: memref<2x16xf32, #tpu.memory_space<vmem>>) attributes {dimension_semantics = [#tpu.dimension_semantics<arbitrary>], iteration_bounds = array<i64: 1>, scalar_prefetch = 0 : i64, scratch_operands = 0 : i64, tpu.core_type = #tpu.core_type<tc>, window_params = [{pipeline_mode = #tpu.pipeline_mode<synchronous>, transform_indices = @transform_0, window_bounds = array<i64: 2, 256>}, {pipeline_mode = #tpu.pipeline_mode<synchronous>, transform_indices = @transform_1, window_bounds = array<i64: 256, 128>}, {pipeline_mode = #tpu.pipeline_mode<synchronous>, transform_indices = @transform_2, window_bounds = array<i64: 128, 128>}, {pipeline_mode = #tpu.pipeline_mode<synchronous>, transform_indices = @transform_3, window_bounds = array<i64: 1, 128>}, {pipeline_mode = #tpu.pipeline_mode<synchronous>, transform_indices = @transform_4, window_bounds = array<i64: 128, 128>}, {pipeline_mode = #tpu.pipeline_mode<synchronous>, transform_indices = @transform_5, window_bounds = array<i64: 1, 128>}, {pipeline_mode = #tpu.pipeline_mode<synchronous>, transform_indices = @transform_6, window_bounds = array<i64: 128, 256>}, {pipeline_mode = #tpu.pipeline_mode<synchronous>, transform_indices = @transform_7, window_bounds = array<i64: 128, 16>}, {pipeline_mode = #tpu.pipeline_mode<synchronous>, transform_indices = @transform_8, window_bounds = array<i64: 2, 256>}, {pipeline_mode = #tpu.pipeline_mode<synchronous>, transform_indices = @transform_9, window_bounds = array<i64: 2, 16>}]} {
    %c0 = arith.constant 0 : index
    %c0_0 = arith.constant 0 : index
    %0 = vector.load %arg1[%c0, %c0_0] : memref<2x256xf32, #tpu.memory_space<vmem>>, vector<2x256xf32>
    %c0_1 = arith.constant 0 : index
    %c0_2 = arith.constant 0 : index
    %1 = vector.load %arg2[%c0_1, %c0_2] : memref<256x128xf32, #tpu.memory_space<vmem>>, vector<256x128xf32>
    %cst = arith.constant dense<0.000000e+00> : vector<2x128xf32>
    %2 = tpu.matmul %0, %1, %cst {dimension_numbers = #tpu.dot_dimension_numbers<[1], [0], [0], [1], [0, 0, 1, 1], [], []>} : vector<2x256xf32>, vector<256x128xf32>, vector<2x128xf32> -> vector<2x128xf32>
    %3 = arith.truncf %2 : vector<2x128xf32> to vector<2x128xbf16>
    %c0_3 = arith.constant 0 : index
    %c0_4 = arith.constant 0 : index
    %4 = vector.load %arg3[%c0_3, %c0_4] : memref<128x128xf32, #tpu.memory_space<vmem>>, vector<128x128xf32>
    %5 = arith.truncf %4 : vector<128x128xf32> to vector<128x128xbf16>
    %cst_5 = arith.constant dense<0.000000e+00> : vector<2x128xf32>
    %6 = tpu.matmul %3, %5, %cst_5 {dimension_numbers = #tpu.dot_dimension_numbers<[1], [0], [0], [1], [0, 0, 1, 1], [], []>} : vector<2x128xbf16>, vector<128x128xbf16>, vector<2x128xf32> -> vector<2x128xf32>
    %c0_6 = arith.constant 0 : index
    %c0_7 = arith.constant 0 : index
    %7 = vector.load %arg4[%c0_6, %c0_7] : memref<1x128xf32, #tpu.memory_space<vmem>>, vector<1x128xf32>
    %8 = vector.broadcast %7 : vector<1x128xf32> to vector<2x128xf32>
    %9 = arith.addf %6, %8 : vector<2x128xf32>
    %cst_8 = arith.constant 0.000000e+00 : f32
    %10 = vector.broadcast %cst_8 : f32 to vector<2x128xf32>
    %11 = arith.maximumf %9, %10 : vector<2x128xf32>
    %12 = arith.truncf %11 : vector<2x128xf32> to vector<2x128xbf16>
    %c0_9 = arith.constant 0 : index
    %c0_10 = arith.constant 0 : index
    %13 = vector.load %arg5[%c0_9, %c0_10] : memref<128x128xf32, #tpu.memory_space<vmem>>, vector<128x128xf32>
    %14 = arith.truncf %13 : vector<128x128xf32> to vector<128x128xbf16>
    %cst_11 = arith.constant dense<0.000000e+00> : vector<2x128xf32>
    %15 = tpu.matmul %12, %14, %cst_11 {dimension_numbers = #tpu.dot_dimension_numbers<[1], [0], [0], [1], [0, 0, 1, 1], [], []>} : vector<2x128xbf16>, vector<128x128xbf16>, vector<2x128xf32> -> vector<2x128xf32>
    %c0_12 = arith.constant 0 : index
    %c0_13 = arith.constant 0 : index
    %16 = vector.load %arg6[%c0_12, %c0_13] : memref<1x128xf32, #tpu.memory_space<vmem>>, vector<1x128xf32>
    %17 = vector.broadcast %16 : vector<1x128xf32> to vector<2x128xf32>
    %18 = arith.addf %15, %17 : vector<2x128xf32>
    %19 = arith.negf %18 : vector<2x128xf32>
    %20 = math.exp %19 : vector<2x128xf32>
    %cst_14 = arith.constant 1.000000e+00 : f32
    %21 = vector.broadcast %cst_14 : f32 to vector<2x128xf32>
    %22 = arith.addf %21, %20 : vector<2x128xf32>
    %23 = arith.divf %21, %22 : vector<2x128xf32>
    %c0_15 = arith.constant 0 : index
    %c0_16 = arith.constant 0 : index
    %24 = vector.load %arg7[%c0_15, %c0_16] : memref<128x256xf32, #tpu.memory_space<vmem>>, vector<128x256xf32>
    %cst_17 = arith.constant dense<0.000000e+00> : vector<2x256xf32>
    %25 = tpu.matmul %23, %24, %cst_17 {dimension_numbers = #tpu.dot_dimension_numbers<[1], [0], [0], [1], [0, 0, 1, 1], [], []>} : vector<2x128xf32>, vector<128x256xf32>, vector<2x256xf32> -> vector<2x256xf32>
    %26 = arith.truncf %25 : vector<2x256xf32> to vector<2x256xbf16>
    %c0_18 = arith.constant 0 : index
    %c0_19 = arith.constant 0 : index
    %27 = vector.load %arg9[%c0_18, %c0_19] : memref<2x256xbf16, #tpu.memory_space<vmem>>, vector<2x256xbf16>
    tpu.vector_store %arg9[%c0_18, %c0_19], %26 {strides = array<i32>} : memref<2x256xbf16, #tpu.memory_space<vmem>>, vector<2x256xbf16>,
    %c0_20 = arith.constant 0 : index
    %c0_21 = arith.constant 0 : index
    %28 = vector.load %arg8[%c0_20, %c0_21] : memref<128x16xf32, #tpu.memory_space<vmem>>, vector<128x16xf32>
    %cst_22 = arith.constant dense<0.000000e+00> : vector<2x16xf32>
    %29 = tpu.matmul %23, %28, %cst_22 {dimension_numbers = #tpu.dot_dimension_numbers<[1], [0], [0], [1], [0, 0, 1, 1], [], []>} : vector<2x128xf32>, vector<128x16xf32>, vector<2x16xf32> -> vector<2x16xf32>
    %cst_23 = arith.constant 0.000000e+00 : f32
    %30 = vector.broadcast %cst_23 : f32 to vector<2x16xf32>
    %31 = arith.cmpf ogt, %29, %30 : vector<2x16xf32>
    %32 = math.rsqrt %29 : vector<2x16xf32>
    %cst_24 = arith.constant 0.000000e+00 : f32
    %33 = vector.broadcast %cst_24 : f32 to vector<2x16xf32>
    %34 = arith.select %31, %32, %33 : vector<2x16xi1>, vector<2x16xf32>
    %c0_25 = arith.constant 0 : index
    %c0_26 = arith.constant 0 : index
    %35 = vector.load %arg10[%c0_25, %c0_26] : memref<2x16xf32, #tpu.memory_space<vmem>>, vector<2x16xf32>
    tpu.vector_store %arg10[%c0_25, %c0_26], %34 {strides = array<i32>} : memref<2x16xf32, #tpu.memory_space<vmem>>, vector<2x16xf32>,
    return
  }
  func.func @transform_0(%arg0: i32) -> (i32, i32) {
    %c0_i32 = arith.constant 0 : i32
    %c0_i32_0 = arith.constant 0 : i32
    %c0_i32_1 = arith.constant 0 : i32
    return %c0_i32, %c0_i32_0 : i32, i32
  }
  func.func @transform_1(%arg0: i32) -> (i32, i32) {
    %c0_i32 = arith.constant 0 : i32
    %c0_i32_0 = arith.constant 0 : i32
    %c0_i32_1 = arith.constant 0 : i32
    return %c0_i32, %c0_i32_0 : i32, i32
  }
  func.func @transform_2(%arg0: i32) -> (i32, i32) {
    %c0_i32 = arith.constant 0 : i32
    %c0_i32_0 = arith.constant 0 : i32
    %c0_i32_1 = arith.constant 0 : i32
    return %c0_i32, %c0_i32_0 : i32, i32
  }
  func.func @transform_3(%arg0: i32) -> (i32, i32) {
    %c0_i32 = arith.constant 0 : i32
    %c0_i32_0 = arith.constant 0 : i32
    %c0_i32_1 = arith.constant 0 : i32
    return %c0_i32, %c0_i32_0 : i32, i32
  }
  func.func @transform_4(%arg0: i32) -> (i32, i32) {
    %c0_i32 = arith.constant 0 : i32
    %c0_i32_0 = arith.constant 0 : i32
    %c0_i32_1 = arith.constant 0 : i32
    return %c0_i32, %c0_i32_0 : i32, i32
  }
  func.func @transform_5(%arg0: i32) -> (i32, i32) {
    %c0_i32 = arith.constant 0 : i32
    %c0_i32_0 = arith.constant 0 : i32
    %c0_i32_1 = arith.constant 0 : i32
    return %c0_i32, %c0_i32_0 : i32, i32
  }
  func.func @transform_6(%arg0: i32) -> (i32, i32) {
    %c0_i32 = arith.constant 0 : i32
    %c0_i32_0 = arith.constant 0 : i32
    %c0_i32_1 = arith.constant 0 : i32
    return %c0_i32, %c0_i32_0 : i32, i32
  }
  func.func @transform_7(%arg0: i32) -> (i32, i32) {
    %c0_i32 = arith.constant 0 : i32
    %c0_i32_0 = arith.constant 0 : i32
    %c0_i32_1 = arith.constant 0 : i32
    return %c0_i32, %c0_i32_0 : i32, i32
  }
  func.func @transform_8(%arg0: i32) -> (i32, i32) {
    %c0_i32 = arith.constant 0 : i32
    %c0_i32_0 = arith.constant 0 : i32
    %c0_i32_1 = arith.constant 0 : i32
    return %c0_i32, %c0_i32_0 : i32, i32
  }
  func.func @transform_9(%arg0: i32) -> (i32, i32) {
    %c0_i32 = arith.constant 0 : i32
    %c0_i32_0 = arith.constant 0 : i32
    %c0_i32_1 = arith.constant 0 : i32
    return %c0_i32, %c0_i32_0 : i32, i32
  }
}

module attributes {stable_mosaic.version = 11 : i64} {
  func.func @kernel(%arg0: i32, %arg1: i32, %arg2: i32, %arg3: memref<32x16xf32, #tpu.memory_space<vmem>>, %arg4: memref<16x128xf32, #tpu.memory_space<vmem>>, %arg5: memref<1x128xf32, #tpu.memory_space<vmem>>, %arg6: memref<32x128xf32, #tpu.memory_space<vmem>>, %arg7: memref<32x128xf32, #tpu.memory_space<vmem>>) attributes {dimension_semantics = [#tpu.dimension_semantics<parallel>, #tpu.dimension_semantics<parallel>, #tpu.dimension_semantics<arbitrary>], iteration_bounds = array<i64: 1, 1, 1>, scalar_prefetch = 0 : i64, scratch_operands = 1 : i64, tpu.core_type = #tpu.core_type<tc>, window_params = [{transform_indices = @transform_0, window_bounds = array<i64: 32, 16>}, {transform_indices = @transform_1, window_bounds = array<i64: 16, 128>}, {transform_indices = @transform_2, window_bounds = array<i64: 1, 128>}, {transform_indices = @transform_3, window_bounds = array<i64: 32, 128>}]} {
    %c0_i32 = arith.constant 0 : i32
    %0 = arith.cmpi eq, %arg2, %c0_i32 : i32
    %1 = arith.extui %0 : i1 to i32
    %c0_i32_0 = arith.constant 0 : i32
    %2 = arith.cmpi ne, %1, %c0_i32_0 : i32
    scf.if %2 {
      %cst_10 = arith.constant 0.000000e+00 : f32
      %14 = vector.broadcast %cst_10 : f32 to vector<32x128xf32>
      %c0_11 = arith.constant 0 : index
      %c0_12 = arith.constant 0 : index
      %15 = vector.load %arg7[%c0_11, %c0_12] : memref<32x128xf32, #tpu.memory_space<vmem>>, vector<32x128xf32>
      tpu.vector_store %arg7[%c0_11, %c0_12], %14 {strides = array<i32>} : memref<32x128xf32, #tpu.memory_space<vmem>>, vector<32x128xf32>,
    } else {
    }
    %c0 = arith.constant 0 : index
    %c0_1 = arith.constant 0 : index
    %3 = vector.load %arg7[%c0, %c0_1] : memref<32x128xf32, #tpu.memory_space<vmem>>, vector<32x128xf32>
    %c0_2 = arith.constant 0 : index
    %c0_3 = arith.constant 0 : index
    %4 = vector.load %arg3[%c0_2, %c0_3] : memref<32x16xf32, #tpu.memory_space<vmem>>, vector<32x16xf32>
    %5 = arith.truncf %4 : vector<32x16xf32> to vector<32x16xbf16>
    %c0_4 = arith.constant 0 : index
    %c0_5 = arith.constant 0 : index
    %6 = vector.load %arg4[%c0_4, %c0_5] : memref<16x128xf32, #tpu.memory_space<vmem>>, vector<16x128xf32>
    %7 = arith.truncf %6 : vector<16x128xf32> to vector<16x128xbf16>
    %cst = arith.constant dense<0.000000e+00> : vector<32x128xf32>
    %8 = tpu.matmul %5, %7, %cst {dimension_numbers = #tpu.dot_dimension_numbers<[1], [0], [0], [1], [0, 0, 1, 1], [], []>} : vector<32x16xbf16>, vector<16x128xbf16>, vector<32x128xf32> -> vector<32x128xf32>
    %9 = arith.addf %3, %8 : vector<32x128xf32>
    %c0_6 = arith.constant 0 : index
    %c0_7 = arith.constant 0 : index
    %10 = vector.load %arg7[%c0_6, %c0_7] : memref<32x128xf32, #tpu.memory_space<vmem>>, vector<32x128xf32>
    tpu.vector_store %arg7[%c0_6, %c0_7], %9 {strides = array<i32>} : memref<32x128xf32, #tpu.memory_space<vmem>>, vector<32x128xf32>,
    %c0_i32_8 = arith.constant 0 : i32
    %11 = arith.cmpi eq, %arg2, %c0_i32_8 : i32
    %12 = arith.extui %11 : i1 to i32
    %c0_i32_9 = arith.constant 0 : i32
    %13 = arith.cmpi ne, %12, %c0_i32_9 : i32
    scf.if %13 {
      %c0_10 = arith.constant 0 : index
      %c0_11 = arith.constant 0 : index
      %14 = vector.load %arg7[%c0_10, %c0_11] : memref<32x128xf32, #tpu.memory_space<vmem>>, vector<32x128xf32>
      %c0_12 = arith.constant 0 : index
      %c0_13 = arith.constant 0 : index
      %15 = vector.load %arg5[%c0_12, %c0_13] : memref<1x128xf32, #tpu.memory_space<vmem>>, vector<1x128xf32>
      %16 = vector.broadcast %15 : vector<1x128xf32> to vector<32x128xf32>
      %17 = arith.addf %14, %16 : vector<32x128xf32>
      %c0_14 = arith.constant 0 : index
      %c0_15 = arith.constant 0 : index
      %18 = vector.load %arg6[%c0_14, %c0_15] : memref<32x128xf32, #tpu.memory_space<vmem>>, vector<32x128xf32>
      tpu.vector_store %arg6[%c0_14, %c0_15], %17 {strides = array<i32>} : memref<32x128xf32, #tpu.memory_space<vmem>>, vector<32x128xf32>,
    } else {
    }
    return
  }
  func.func @transform_0(%arg0: i32, %arg1: i32, %arg2: i32) -> (i32, i32) {
    %c0_i32 = arith.constant 0 : i32
    return %arg0, %arg2 : i32, i32
  }
  func.func @transform_1(%arg0: i32, %arg1: i32, %arg2: i32) -> (i32, i32) {
    %c0_i32 = arith.constant 0 : i32
    return %arg2, %arg1 : i32, i32
  }
  func.func @transform_2(%arg0: i32, %arg1: i32, %arg2: i32) -> (i32, i32) {
    %c0_i32 = arith.constant 0 : i32
    %c0_i32_0 = arith.constant 0 : i32
    return %c0_i32, %arg1 : i32, i32
  }
  func.func @transform_3(%arg0: i32, %arg1: i32, %arg2: i32) -> (i32, i32) {
    %c0_i32 = arith.constant 0 : i32
    return %arg0, %arg1 : i32, i32
  }
}

module attributes {stable_mosaic.version = 11 : i64} {
  func.func @_lap_relu_kernel(%arg0: i32, %arg1: i32, %arg2: i32, %arg3: memref<1x16x16xbf16, #tpu.memory_space<vmem>>, %arg4: memref<1x16x128xf32, #tpu.memory_space<vmem>>, %arg5: memref<1x16x1xf32, #tpu.memory_space<vmem>>, %arg6: memref<1x16x128xf32, #tpu.memory_space<vmem>>, %arg7: memref<1x16x1xf32, #tpu.memory_space<vmem>>, %arg8: memref<1x16x128xf32, #tpu.memory_space<vmem>>, %arg9: memref<16x128xf32, #tpu.memory_space<vmem>>) attributes {dimension_semantics = [#tpu.dimension_semantics<parallel>, #tpu.dimension_semantics<parallel>, #tpu.dimension_semantics<arbitrary>], iteration_bounds = array<i64: 2, 1, 1>, scalar_prefetch = 0 : i64, scratch_operands = 1 : i64, tpu.core_type = #tpu.core_type<tc>, window_params = [{transform_indices = @transform_0, window_bounds = array<i64: 1, 16, 16>}, {transform_indices = @transform_1, window_bounds = array<i64: 1, 16, 128>}, {transform_indices = @transform_2, window_bounds = array<i64: 1, 16, 1>}, {transform_indices = @transform_3, window_bounds = array<i64: 1, 16, 128>}, {transform_indices = @transform_4, window_bounds = array<i64: 1, 16, 1>}, {transform_indices = @transform_5, window_bounds = array<i64: 1, 16, 128>}]} {
    %c0_i32 = arith.constant 0 : i32
    %0 = arith.cmpi eq, %arg2, %c0_i32 : i32
    %1 = arith.extui %0 : i1 to i32
    %c0_i32_0 = arith.constant 0 : i32
    %2 = arith.cmpi ne, %1, %c0_i32_0 : i32
    scf.if %2 {
      %cst_15 = arith.constant 0.000000e+00 : f32
      %19 = vector.broadcast %cst_15 : f32 to vector<16x128xf32>
      %c0_16 = arith.constant 0 : index
      %c0_17 = arith.constant 0 : index
      %20 = vector.load %arg9[%c0_16, %c0_17] : memref<16x128xf32, #tpu.memory_space<vmem>>, vector<16x128xf32>
      tpu.vector_store %arg9[%c0_16, %c0_17], %19 {strides = array<i32>} : memref<16x128xf32, #tpu.memory_space<vmem>>, vector<16x128xf32>,
    } else {
    }
    %c0 = arith.constant 0 : index
    %c0_1 = arith.constant 0 : index
    %c0_2 = arith.constant 0 : index
    %3 = vector.load %arg5[%c0, %c0_1, %c0_2] : memref<1x16x1xf32, #tpu.memory_space<vmem>>, vector<1x16x1xf32>
    %4 = vector.shape_cast %3 : vector<1x16x1xf32> to vector<16x1xf32>
    %c0_3 = arith.constant 0 : index
    %c0_4 = arith.constant 0 : index
    %c0_5 = arith.constant 0 : index
    %5 = vector.load %arg4[%c0_3, %c0_4, %c0_5] : memref<1x16x128xf32, #tpu.memory_space<vmem>>, vector<1x16x128xf32>
    %6 = vector.shape_cast %5 : vector<1x16x128xf32> to vector<16x128xf32>
    %7 = vector.broadcast %4 : vector<16x1xf32> to vector<16x128xf32>
    %8 = arith.mulf %7, %6 : vector<16x128xf32>
    %9 = arith.truncf %8 : vector<16x128xf32> to vector<16x128xbf16>
    %c0_6 = arith.constant 0 : index
    %c0_7 = arith.constant 0 : index
    %10 = vector.load %arg9[%c0_6, %c0_7] : memref<16x128xf32, #tpu.memory_space<vmem>>, vector<16x128xf32>
    %c0_8 = arith.constant 0 : index
    %c0_9 = arith.constant 0 : index
    %c0_10 = arith.constant 0 : index
    %11 = vector.load %arg3[%c0_8, %c0_9, %c0_10] : memref<1x16x16xbf16, #tpu.memory_space<vmem>>, vector<1x16x16xbf16>
    %12 = vector.shape_cast %11 : vector<1x16x16xbf16> to vector<16x16xbf16>
    %cst = arith.constant dense<0.000000e+00> : vector<16x128xf32>
    %13 = tpu.matmul %12, %9, %cst {dimension_numbers = #tpu.dot_dimension_numbers<[1], [0], [0], [1], [0, 0, 1, 1], [], []>} : vector<16x16xbf16>, vector<16x128xbf16>, vector<16x128xf32> -> vector<16x128xf32>
    %14 = arith.addf %10, %13 : vector<16x128xf32>
    %c0_11 = arith.constant 0 : index
    %c0_12 = arith.constant 0 : index
    %15 = vector.load %arg9[%c0_11, %c0_12] : memref<16x128xf32, #tpu.memory_space<vmem>>, vector<16x128xf32>
    tpu.vector_store %arg9[%c0_11, %c0_12], %14 {strides = array<i32>} : memref<16x128xf32, #tpu.memory_space<vmem>>, vector<16x128xf32>,
    %c0_i32_13 = arith.constant 0 : i32
    %16 = arith.cmpi eq, %arg2, %c0_i32_13 : i32
    %17 = arith.extui %16 : i1 to i32
    %c0_i32_14 = arith.constant 0 : i32
    %18 = arith.cmpi ne, %17, %c0_i32_14 : i32
    scf.if %18 {
      %c0_15 = arith.constant 0 : index
      %c0_16 = arith.constant 0 : index
      %c0_17 = arith.constant 0 : index
      %19 = vector.load %arg6[%c0_15, %c0_16, %c0_17] : memref<1x16x128xf32, #tpu.memory_space<vmem>>, vector<1x16x128xf32>
      %20 = vector.shape_cast %19 : vector<1x16x128xf32> to vector<16x128xf32>
      %c0_18 = arith.constant 0 : index
      %c0_19 = arith.constant 0 : index
      %c0_20 = arith.constant 0 : index
      %21 = vector.load %arg7[%c0_18, %c0_19, %c0_20] : memref<1x16x1xf32, #tpu.memory_space<vmem>>, vector<1x16x1xf32>
      %22 = vector.shape_cast %21 : vector<1x16x1xf32> to vector<16x1xf32>
      %c0_21 = arith.constant 0 : index
      %c0_22 = arith.constant 0 : index
      %23 = vector.load %arg9[%c0_21, %c0_22] : memref<16x128xf32, #tpu.memory_space<vmem>>, vector<16x128xf32>
      %24 = vector.broadcast %22 : vector<16x1xf32> to vector<16x128xf32>
      %25 = arith.mulf %24, %23 : vector<16x128xf32>
      %26 = arith.subf %20, %25 : vector<16x128xf32>
      %cst_23 = arith.constant 0.000000e+00 : f32
      %27 = vector.broadcast %cst_23 : f32 to vector<16x128xf32>
      %28 = arith.maximumf %26, %27 : vector<16x128xf32>
      %c0_24 = arith.constant 0 : index
      %c0_25 = arith.constant 0 : index
      %c0_26 = arith.constant 0 : index
      %29 = vector.load %arg8[%c0_24, %c0_25, %c0_26] : memref<1x16x128xf32, #tpu.memory_space<vmem>>, vector<1x16x128xf32>
      %30 = vector.shape_cast %29 : vector<1x16x128xf32> to vector<16x128xf32>
      %31 = vector.shape_cast %28 : vector<16x128xf32> to vector<1x16x128xf32>
      tpu.vector_store %arg8[%c0_24, %c0_25, %c0_26], %31 {strides = array<i32>} : memref<1x16x128xf32, #tpu.memory_space<vmem>>, vector<1x16x128xf32>,
    } else {
    }
    return
  }
  func.func @transform_0(%arg0: i32, %arg1: i32, %arg2: i32) -> (i32, i32, i32) {
    %c0_i32 = arith.constant 0 : i32
    return %arg0, %arg1, %arg2 : i32, i32, i32
  }
  func.func @transform_1(%arg0: i32, %arg1: i32, %arg2: i32) -> (i32, i32, i32) {
    %c0_i32 = arith.constant 0 : i32
    %c0_i32_0 = arith.constant 0 : i32
    return %arg0, %arg2, %c0_i32 : i32, i32, i32
  }
  func.func @transform_2(%arg0: i32, %arg1: i32, %arg2: i32) -> (i32, i32, i32) {
    %c0_i32 = arith.constant 0 : i32
    %c0_i32_0 = arith.constant 0 : i32
    return %arg0, %arg2, %c0_i32 : i32, i32, i32
  }
  func.func @transform_3(%arg0: i32, %arg1: i32, %arg2: i32) -> (i32, i32, i32) {
    %c0_i32 = arith.constant 0 : i32
    %c0_i32_0 = arith.constant 0 : i32
    return %arg0, %arg1, %c0_i32 : i32, i32, i32
  }
  func.func @transform_4(%arg0: i32, %arg1: i32, %arg2: i32) -> (i32, i32, i32) {
    %c0_i32 = arith.constant 0 : i32
    %c0_i32_0 = arith.constant 0 : i32
    return %arg0, %arg1, %c0_i32 : i32, i32, i32
  }
  func.func @transform_5(%arg0: i32, %arg1: i32, %arg2: i32) -> (i32, i32, i32) {
    %c0_i32 = arith.constant 0 : i32
    %c0_i32_0 = arith.constant 0 : i32
    return %arg0, %arg1, %c0_i32 : i32, i32, i32
  }
}

module attributes {stable_mosaic.version = 11 : i64} {
  func.func @kernel(%arg0: i32, %arg1: i32, %arg2: i32, %arg3: memref<32x128xf32, #tpu.memory_space<vmem>>, %arg4: memref<128x128xf32, #tpu.memory_space<vmem>>, %arg5: memref<1x128xf32, #tpu.memory_space<vmem>>, %arg6: memref<32x128xf32, #tpu.memory_space<vmem>>, %arg7: memref<32x128xf32, #tpu.memory_space<vmem>>) attributes {dimension_semantics = [#tpu.dimension_semantics<parallel>, #tpu.dimension_semantics<parallel>, #tpu.dimension_semantics<arbitrary>], iteration_bounds = array<i64: 1, 1, 1>, scalar_prefetch = 0 : i64, scratch_operands = 1 : i64, tpu.core_type = #tpu.core_type<tc>, window_params = [{transform_indices = @transform_0, window_bounds = array<i64: 32, 128>}, {transform_indices = @transform_1, window_bounds = array<i64: 128, 128>}, {transform_indices = @transform_2, window_bounds = array<i64: 1, 128>}, {transform_indices = @transform_3, window_bounds = array<i64: 32, 128>}]} {
    %c0_i32 = arith.constant 0 : i32
    %0 = arith.cmpi eq, %arg2, %c0_i32 : i32
    %1 = arith.extui %0 : i1 to i32
    %c0_i32_0 = arith.constant 0 : i32
    %2 = arith.cmpi ne, %1, %c0_i32_0 : i32
    scf.if %2 {
      %cst_10 = arith.constant 0.000000e+00 : f32
      %14 = vector.broadcast %cst_10 : f32 to vector<32x128xf32>
      %c0_11 = arith.constant 0 : index
      %c0_12 = arith.constant 0 : index
      %15 = vector.load %arg7[%c0_11, %c0_12] : memref<32x128xf32, #tpu.memory_space<vmem>>, vector<32x128xf32>
      tpu.vector_store %arg7[%c0_11, %c0_12], %14 {strides = array<i32>} : memref<32x128xf32, #tpu.memory_space<vmem>>, vector<32x128xf32>,
    } else {
    }
    %c0 = arith.constant 0 : index
    %c0_1 = arith.constant 0 : index
    %3 = vector.load %arg7[%c0, %c0_1] : memref<32x128xf32, #tpu.memory_space<vmem>>, vector<32x128xf32>
    %c0_2 = arith.constant 0 : index
    %c0_3 = arith.constant 0 : index
    %4 = vector.load %arg3[%c0_2, %c0_3] : memref<32x128xf32, #tpu.memory_space<vmem>>, vector<32x128xf32>
    %5 = arith.truncf %4 : vector<32x128xf32> to vector<32x128xbf16>
    %c0_4 = arith.constant 0 : index
    %c0_5 = arith.constant 0 : index
    %6 = vector.load %arg4[%c0_4, %c0_5] : memref<128x128xf32, #tpu.memory_space<vmem>>, vector<128x128xf32>
    %7 = arith.truncf %6 : vector<128x128xf32> to vector<128x128xbf16>
    %cst = arith.constant dense<0.000000e+00> : vector<32x128xf32>
    %8 = tpu.matmul %5, %7, %cst {dimension_numbers = #tpu.dot_dimension_numbers<[1], [0], [0], [1], [0, 0, 1, 1], [], []>} : vector<32x128xbf16>, vector<128x128xbf16>, vector<32x128xf32> -> vector<32x128xf32>
    %9 = arith.addf %3, %8 : vector<32x128xf32>
    %c0_6 = arith.constant 0 : index
    %c0_7 = arith.constant 0 : index
    %10 = vector.load %arg7[%c0_6, %c0_7] : memref<32x128xf32, #tpu.memory_space<vmem>>, vector<32x128xf32>
    tpu.vector_store %arg7[%c0_6, %c0_7], %9 {strides = array<i32>} : memref<32x128xf32, #tpu.memory_space<vmem>>, vector<32x128xf32>,
    %c0_i32_8 = arith.constant 0 : i32
    %11 = arith.cmpi eq, %arg2, %c0_i32_8 : i32
    %12 = arith.extui %11 : i1 to i32
    %c0_i32_9 = arith.constant 0 : i32
    %13 = arith.cmpi ne, %12, %c0_i32_9 : i32
    scf.if %13 {
      %c0_10 = arith.constant 0 : index
      %c0_11 = arith.constant 0 : index
      %14 = vector.load %arg7[%c0_10, %c0_11] : memref<32x128xf32, #tpu.memory_space<vmem>>, vector<32x128xf32>
      %c0_12 = arith.constant 0 : index
      %c0_13 = arith.constant 0 : index
      %15 = vector.load %arg5[%c0_12, %c0_13] : memref<1x128xf32, #tpu.memory_space<vmem>>, vector<1x128xf32>
      %16 = vector.broadcast %15 : vector<1x128xf32> to vector<32x128xf32>
      %17 = arith.addf %14, %16 : vector<32x128xf32>
      %c0_14 = arith.constant 0 : index
      %c0_15 = arith.constant 0 : index
      %18 = vector.load %arg6[%c0_14, %c0_15] : memref<32x128xf32, #tpu.memory_space<vmem>>, vector<32x128xf32>
      tpu.vector_store %arg6[%c0_14, %c0_15], %17 {strides = array<i32>} : memref<32x128xf32, #tpu.memory_space<vmem>>, vector<32x128xf32>,
    } else {
    }
    return
  }
  func.func @transform_0(%arg0: i32, %arg1: i32, %arg2: i32) -> (i32, i32) {
    %c0_i32 = arith.constant 0 : i32
    return %arg0, %arg2 : i32, i32
  }
  func.func @transform_1(%arg0: i32, %arg1: i32, %arg2: i32) -> (i32, i32) {
    %c0_i32 = arith.constant 0 : i32
    return %arg2, %arg1 : i32, i32
  }
  func.func @transform_2(%arg0: i32, %arg1: i32, %arg2: i32) -> (i32, i32) {
    %c0_i32 = arith.constant 0 : i32
    %c0_i32_0 = arith.constant 0 : i32
    return %c0_i32, %arg1 : i32, i32
  }
  func.func @transform_3(%arg0: i32, %arg1: i32, %arg2: i32) -> (i32, i32) {
    %c0_i32 = arith.constant 0 : i32
    return %arg0, %arg1 : i32, i32
  }
}

module attributes {stable_mosaic.version = 11 : i64} {
  func.func @kernel(%arg0: i32, %arg1: i32, %arg2: i32, %arg3: memref<2x512xf32, #tpu.memory_space<vmem>>, %arg4: memref<512x128xf32, #tpu.memory_space<vmem>>, %arg5: memref<1x128xf32, #tpu.memory_space<vmem>>, %arg6: memref<2x128xf32, #tpu.memory_space<vmem>>, %arg7: memref<2x128xf32, #tpu.memory_space<vmem>>) attributes {dimension_semantics = [#tpu.dimension_semantics<parallel>, #tpu.dimension_semantics<parallel>, #tpu.dimension_semantics<arbitrary>], iteration_bounds = array<i64: 1, 1, 4>, scalar_prefetch = 0 : i64, scratch_operands = 1 : i64, tpu.core_type = #tpu.core_type<tc>, window_params = [{transform_indices = @transform_0, window_bounds = array<i64: 2, 512>}, {transform_indices = @transform_1, window_bounds = array<i64: 512, 128>}, {transform_indices = @transform_2, window_bounds = array<i64: 1, 128>}, {transform_indices = @transform_3, window_bounds = array<i64: 2, 128>}]} {
    %c0_i32 = arith.constant 0 : i32
    %0 = arith.cmpi eq, %arg2, %c0_i32 : i32
    %1 = arith.extui %0 : i1 to i32
    %c0_i32_0 = arith.constant 0 : i32
    %2 = arith.cmpi ne, %1, %c0_i32_0 : i32
    scf.if %2 {
      %cst_9 = arith.constant 0.000000e+00 : f32
      %14 = vector.broadcast %cst_9 : f32 to vector<2x128xf32>
      %c0_10 = arith.constant 0 : index
      %c0_11 = arith.constant 0 : index
      %15 = vector.load %arg7[%c0_10, %c0_11] : memref<2x128xf32, #tpu.memory_space<vmem>>, vector<2x128xf32>
      tpu.vector_store %arg7[%c0_10, %c0_11], %14 {strides = array<i32>} : memref<2x128xf32, #tpu.memory_space<vmem>>, vector<2x128xf32>,
    } else {
    }
    %c0 = arith.constant 0 : index
    %c0_1 = arith.constant 0 : index
    %3 = vector.load %arg7[%c0, %c0_1] : memref<2x128xf32, #tpu.memory_space<vmem>>, vector<2x128xf32>
    %c0_2 = arith.constant 0 : index
    %c0_3 = arith.constant 0 : index
    %4 = vector.load %arg3[%c0_2, %c0_3] : memref<2x512xf32, #tpu.memory_space<vmem>>, vector<2x512xf32>
    %5 = arith.truncf %4 : vector<2x512xf32> to vector<2x512xbf16>
    %c0_4 = arith.constant 0 : index
    %c0_5 = arith.constant 0 : index
    %6 = vector.load %arg4[%c0_4, %c0_5] : memref<512x128xf32, #tpu.memory_space<vmem>>, vector<512x128xf32>
    %7 = arith.truncf %6 : vector<512x128xf32> to vector<512x128xbf16>
    %cst = arith.constant dense<0.000000e+00> : vector<2x128xf32>
    %8 = tpu.matmul %5, %7, %cst {dimension_numbers = #tpu.dot_dimension_numbers<[1], [0], [0], [1], [0, 0, 1, 1], [], []>} : vector<2x512xbf16>, vector<512x128xbf16>, vector<2x128xf32> -> vector<2x128xf32>
    %9 = arith.addf %3, %8 : vector<2x128xf32>
    %c0_6 = arith.constant 0 : index
    %c0_7 = arith.constant 0 : index
    %10 = vector.load %arg7[%c0_6, %c0_7] : memref<2x128xf32, #tpu.memory_space<vmem>>, vector<2x128xf32>
    tpu.vector_store %arg7[%c0_6, %c0_7], %9 {strides = array<i32>} : memref<2x128xf32, #tpu.memory_space<vmem>>, vector<2x128xf32>,
    %c3_i32 = arith.constant 3 : i32
    %11 = arith.cmpi eq, %arg2, %c3_i32 : i32
    %12 = arith.extui %11 : i1 to i32
    %c0_i32_8 = arith.constant 0 : i32
    %13 = arith.cmpi ne, %12, %c0_i32_8 : i32
    scf.if %13 {
      %c0_9 = arith.constant 0 : index
      %c0_10 = arith.constant 0 : index
      %14 = vector.load %arg7[%c0_9, %c0_10] : memref<2x128xf32, #tpu.memory_space<vmem>>, vector<2x128xf32>
      %c0_11 = arith.constant 0 : index
      %c0_12 = arith.constant 0 : index
      %15 = vector.load %arg5[%c0_11, %c0_12] : memref<1x128xf32, #tpu.memory_space<vmem>>, vector<1x128xf32>
      %16 = vector.broadcast %15 : vector<1x128xf32> to vector<2x128xf32>
      %17 = arith.addf %14, %16 : vector<2x128xf32>
      %c0_13 = arith.constant 0 : index
      %c0_14 = arith.constant 0 : index
      %18 = vector.load %arg6[%c0_13, %c0_14] : memref<2x128xf32, #tpu.memory_space<vmem>>, vector<2x128xf32>
      tpu.vector_store %arg6[%c0_13, %c0_14], %17 {strides = array<i32>} : memref<2x128xf32, #tpu.memory_space<vmem>>, vector<2x128xf32>,
    } else {
    }
    return
  }
  func.func @transform_0(%arg0: i32, %arg1: i32, %arg2: i32) -> (i32, i32) {
    %c0_i32 = arith.constant 0 : i32
    return %arg0, %arg2 : i32, i32
  }
  func.func @transform_1(%arg0: i32, %arg1: i32, %arg2: i32) -> (i32, i32) {
    %c0_i32 = arith.constant 0 : i32
    return %arg2, %arg1 : i32, i32
  }
  func.func @transform_2(%arg0: i32, %arg1: i32, %arg2: i32) -> (i32, i32) {
    %c0_i32 = arith.constant 0 : i32
    %c0_i32_0 = arith.constant 0 : i32
    return %c0_i32, %arg1 : i32, i32
  }
  func.func @transform_3(%arg0: i32, %arg1: i32, %arg2: i32) -> (i32, i32) {
    %c0_i32 = arith.constant 0 : i32
    return %arg0, %arg1 : i32, i32
  }
}

</mosaic_0001>

<llo_original>
// kernel: gcn_forward.8
$region0: #{gcn_forward.8}
  #allocation0 [shape = 'u32[]', space=smem, size = 0x4, offset = 0x4, fixed_abs, tag = 'smem constant byte address 0x4 - core index']
  #allocation1 [shape = 'u32[144,128]{1,0:T(1,128)}', space=vmem, size = 0x12000, scoped, tag = 'internal scratch']
  #allocation2 [shape = 'f32[32,128]{1,0:T(8,128)}', space=vmem, size = 0x4000, scoped, tag = 'scratch operand']
  %s0 = inlined_call_operand.vmem [shape: f32[32,16], index: 0, kind: input, shape index: {}]
  %s1 = inlined_call_operand.vmem [shape: f32[16,128], index: 1, kind: input, shape index: {}]
  %s2 = inlined_call_operand.vmem [shape: f32[1,128], index: 2, kind: input, shape index: {}]
  %s3 = inlined_call_operand.vmem [shape: f32[32,128], index: 3, kind: output, shape index: {}]
  %s4 = sld [smem:[#allocation0]]
  $region30: #{gcn_forward.8} parent=0
    _
  %s6 = ssub.s32 1, %s4
  %s7 = scalar_select 0, %s6, %s4
  // Predicated region
  $region2: #{gcn_forward.8} parent=0 // pred_check
    _
  $region3: #{gcn_forward.8} parent=0 // pred_check_branch
    %9 = sbr.rel (0) target = $region5
  $region4: #{gcn_forward.8} parent=0 // pred_region
    _
  $region5: #{gcn_forward.8} parent=0 // pred_fallthru
    _
  // Predicated region
  $region6: #{gcn_forward.8} parent=0 // pred_check
    _
  $region7: #{gcn_forward.8} parent=0 // pred_check_branch
    %11 = sbr.rel (0) target = $region9
  $region8: #{gcn_forward.8} parent=0 // pred_region
    _
  $region9: #{gcn_forward.8} parent=0 // pred_fallthru
    _
  // Predicated region
  $region10: #{gcn_forward.8} parent=0 // pred_check
    _
  $region11: #{gcn_forward.8} parent=0 // pred_check_branch
    %13 = sbr.rel (0) target = $region13
  $region12: #{gcn_forward.8} parent=0 // pred_region
    _
  $region13: #{gcn_forward.8} parent=0 // pred_fallthru
    _
  %p15 = scmp.eq.s32.totalorder 0, 0
  // Predicated region
  $region14: #{gcn_forward.8} parent=0 // pred_check
    %p16 = pneg %p15
  $region15: #{gcn_forward.8} parent=0 // pred_check_branch
    %18 = sbr.rel (%p16) target = $region17
  $region16: #{gcn_forward.8} parent=0 // pred_region
    %19 = vst [vmem:[#allocation2] sm:$0xff] 0.0
    %20 = vst [vmem:[#allocation2 + $0x8] sm:$0xff] 0.0
    %21 = vst [vmem:[#allocation2 + $0x10] sm:$0xff] 0.0
    %22 = vst [vmem:[#allocation2 + $0x18] sm:$0xff] 0.0
  $region17: #{gcn_forward.8} parent=0 // pred_fallthru
    _
  %v23 = vld [vmem:[#allocation2] sm:$0xff]
  %v24 = vld [vmem:[#allocation2 + $0x8] sm:$0xff]
  %v25 = vld [vmem:[#allocation2 + $0x10] sm:$0xff]
  %v26 = vld [vmem:[#allocation2 + $0x18] sm:$0xff]
  %v27 = vld [vmem:[%s0] sm:$0xff]
  %v28 = vld [vmem:[%s0 + $0x8] sm:$0xff]
  %v29 = vld [vmem:[%s0 + $0x10] sm:$0xff]
  %v30 = vld [vmem:[%s0 + $0x18] sm:$0xff]
  %v31 = vpack.c.bf16 %v28, %v27
  %v32 = vpack.c.bf16 %v30, %v29
  %v33 = vld [vmem:[%s1] sm:$0xff]
  %v34 = vld [vmem:[%s1 + $0x8] sm:$0xff]
  %v35 = vpack.c.bf16 %v34, %v33
  %vm36 = vcmask 130048
  %v38 = vsel %vm36, %v31, 0
  %v41 = vsel %vm36, %v32, 0
  %43 = vmatprep.subr.bf16.mxu0 0
  %44 = vmatpush1.bf16.msra.mxu0 %v35
  %45 = vmatprep.subr.bf16.mxu0 0
  %46 = vmatpush1.bf16.msra.mxu0 0
  %47 = vmatprep.subr.bf16.mxu0 0
  %48 = vmatpush1.bf16.msra.mxu0 0
  %49 = vmatprep.subr.bf16.mxu0 0
  %50 = vmatpush1.bf16.msra.mxu0 0
  %51 = vmatprep.subr.bf16.mxu0 0
  %52 = vmatpush1.bf16.msra.mxu0 0
  %53 = vmatprep.subr.bf16.mxu0 0
  %54 = vmatpush1.bf16.msra.mxu0 0
  %55 = vmatprep.subr.bf16.mxu0 0
  %56 = vmatpush1.bf16.msra.mxu0 0
  %57 = vmatprep.subr.bf16.mxu0 0
  %58 = vmatpush1.bf16.msra.mxu0 0
  %59 = vmatprep.subr.bf16.mxu0 0
  %60 = vmatpush1.bf16.msra.mxu0 0
  %61 = vmatprep.subr.bf16.mxu0 0
  %62 = vmatpush1.bf16.msra.mxu0 0
  %63 = vmatprep.subr.bf16.mxu0 0
  %64 = vmatpush1.bf16.msra.mxu0 0
  %65 = vmatprep.subr.bf16.mxu0 0
  %66 = vmatpush1.bf16.msra.mxu0 0
  %67 = vmatprep.subr.bf16.mxu0 0
  %68 = vmatpush1.bf16.msra.mxu0 0
  %69 = vmatprep.subr.bf16.mxu0 0
  %70 = vmatpush1.bf16.msra.mxu0 0
  %71 = vmatprep.subr.bf16.mxu0 0
  %72 = vmatpush1.bf16.msra.mxu0 0
  %73 = vmatprep.subr.bf16.mxu0 0
  %74 = vmatpush1.bf16.msra.mxu0 0
  %75 = vmatprep.mubr.bf16.mxu0 0
  %76 = vmatmul.mubr.bf16.gmra.mrb[0].mxu0 %v38
  %v77 = vpop.f32.mrb[0].mxu0
  %v78 = vadd.f32 0.0, %v77
  %v79 = vpop.f32.mrb[0].mxu0
  %v80 = vpop.f32.mrb[0].mxu0
  %v81 = vadd.f32 0.0, %v80
  %v82 = vpop.f32.mrb[0].mxu0
  %83 = vmatprep.mubr.bf16.mxu0 0
  %84 = vmatmul.mubr.bf16.gmra.mrb[0].mxu0 %v41
  %v85 = vpop.f32.mrb[0].mxu0
  %v86 = vadd.f32 0.0, %v85
  %v87 = vpop.f32.mrb[0].mxu0
  %v88 = vpop.f32.mrb[0].mxu0
  %v89 = vadd.f32 0.0, %v88
  %v90 = vpop.f32.mrb[0].mxu0
  %91 = vdwg.mxu0
  %v92 = vadd.f32 %v23, %v78
  %v93 = vadd.f32 %v24, %v81
  %v94 = vadd.f32 %v25, %v86
  %v95 = vadd.f32 %v26, %v89
  %96 = vst [vmem:[#allocation2] sm:$0xff] %v92
  %97 = vst [vmem:[#allocation2 + $0x8] sm:$0xff] %v93
  %98 = vst [vmem:[#allocation2 + $0x10] sm:$0xff] %v94
  %99 = vst [vmem:[#allocation2 + $0x18] sm:$0xff] %v95
  // Predicated region
  $region18: #{gcn_forward.8} parent=0 // pred_check
    %p100 = pneg %p15
  $region19: #{gcn_forward.8} parent=0 // pred_check_branch
    %102 = sbr.rel (%p100) target = $region21
  $region20: #{gcn_forward.8} parent=0 // pred_region
    %v103 = vld [vmem:[#allocation2] sm:$0xff]
    %v104 = vld [vmem:[#allocation2 + $0x8] sm:$0xff]
    %v105 = vld [vmem:[#allocation2 + $0x10] sm:$0xff]
    %v106 = vld [vmem:[#allocation2 + $0x18] sm:$0xff]
    %v107 = vld [vmem:[%s2] sm:$0x1]
    %v109 = vlaneseq
    %v110 = vshrl.u32 %v109, 7
    %v111 = vsub.s32 0, %v110
    %v112 = vrot.slane %v107, %v111
    %v114 = vadd.f32 %v103, %v112
    %v115 = vadd.f32 %v104, %v112
    %v116 = vadd.f32 %v105, %v112
    %v117 = vadd.f32 %v106, %v112
    %118 = vst [vmem:[%s3] sm:$0xff] %v114
    %119 = vst [vmem:[%s3 + $0x8] sm:$0xff] %v115
    %120 = vst [vmem:[%s3 + $0x10] sm:$0xff] %v116
    %121 = vst [vmem:[%s3 + $0x18] sm:$0xff] %v117
  $region21: #{gcn_forward.8} parent=0 // pred_fallthru
    _
  // Predicated region
  $region22: #{gcn_forward.8} parent=0 // pred_check
    _
  $region23: #{gcn_forward.8} parent=0 // pred_check_branch
    %123 = sbr.rel (0) target = $region25
  $region24: #{gcn_forward.8} parent=0 // pred_region
    _
  $region25: #{gcn_forward.8} parent=0 // pred_fallthru
    _
  // Predicated region
  $region26: #{gcn_forward.8} parent=0 // pred_check
    _
  $region27: #{gcn_forward.8} parent=0 // pred_check_branch
    %125 = sbr.rel (0) target = $region29
  $region28: #{gcn_forward.8} parent=0 // pred_region
    _
  $region29: #{gcn_forward.8} parent=0 // pred_fallthru
    _

// kernel: gcn_forward.11
$region0: #{gcn_forward.11}
  #allocation0 [shape = 'u32[]', space=smem, size = 0x4, offset = 0x4, fixed_abs, tag = 'smem constant byte address 0x4 - core index']
  #allocation1 [shape = 'u32[144,128]{1,0:T(1,128)}', space=vmem, size = 0x12000, scoped, tag = 'internal scratch']
  #allocation2 [shape = 'f32[32,128]{1,0:T(8,128)}', space=vmem, size = 0x4000, scoped, tag = 'scratch operand']
  %s0 = inlined_call_operand.vmem [shape: f32[32,128], index: 0, kind: input, shape index: {}]
  %s1 = inlined_call_operand.vmem [shape: f32[128,128], index: 1, kind: input, shape index: {}]
  %s2 = inlined_call_operand.vmem [shape: f32[1,128], index: 2, kind: input, shape index: {}]
  %s3 = inlined_call_operand.vmem [shape: f32[32,128], index: 3, kind: output, shape index: {}]
  %s4 = sld [smem:[#allocation0]]
  $region30: #{gcn_forward.11} parent=0
    _
  %s6 = ssub.s32 1, %s4
  %s7 = scalar_select 0, %s6, %s4
  // Predicated region
  $region2: #{gcn_forward.11} parent=0 // pred_check
    _
  $region3: #{gcn_forward.11} parent=0 // pred_check_branch
    %9 = sbr.rel (0) target = $region5
  $region4: #{gcn_forward.11} parent=0 // pred_region
    _
  $region5: #{gcn_forward.11} parent=0 // pred_fallthru
    _
  // Predicated region
  $region6: #{gcn_forward.11} parent=0 // pred_check
    _
  $region7: #{gcn_forward.11} parent=0 // pred_check_branch
    %11 = sbr.rel (0) target = $region9
  $region8: #{gcn_forward.11} parent=0 // pred_region
    _
  $region9: #{gcn_forward.11} parent=0 // pred_fallthru
    _
  // Predicated region
  $region10: #{gcn_forward.11} parent=0 // pred_check
    _
  $region11: #{gcn_forward.11} parent=0 // pred_check_branch
    %13 = sbr.rel (0) target = $region13
  $region12: #{gcn_forward.11} parent=0 // pred_region
    _
  $region13: #{gcn_forward.11} parent=0 // pred_fallthru
    _
  %p15 = scmp.eq.s32.totalorder 0, 0
  // Predicated region
  $region14: #{gcn_forward.11} parent=0 // pred_check
    %p16 = pneg %p15
  $region15: #{gcn_forward.11} parent=0 // pred_check_branch
    %18 = sbr.rel (%p16) target = $region17
  $region16: #{gcn_forward.11} parent=0 // pred_region
    %19 = vst [vmem:[#allocation2] sm:$0xff] 0.0
    %20 = vst [vmem:[#allocation2 + $0x8] sm:$0xff] 0.0
    %21 = vst [vmem:[#allocation2 + $0x10] sm:$0xff] 0.0
    %22 = vst [vmem:[#allocation2 + $0x18] sm:$0xff] 0.0
  $region17: #{gcn_forward.11} parent=0 // pred_fallthru
    _
  %v23 = vld [vmem:[#allocation2] sm:$0xff]
  %v24 = vld [vmem:[#allocation2 + $0x8] sm:$0xff]
  %v25 = vld [vmem:[#allocation2 + $0x10] sm:$0xff]
  %v26 = vld [vmem:[#allocation2 + $0x18] sm:$0xff]
  %v27 = vld [vmem:[%s0] sm:$0xff]
  %v28 = vld [vmem:[%s0 + $0x8] sm:$0xff]
  %v29 = vld [vmem:[%s0 + $0x10] sm:$0xff]
  %v30 = vld [vmem:[%s0 + $0x18] sm:$0xff]
  %v31 = vpack.c.bf16 %v28, %v27
  %v32 = vpack.c.bf16 %v30, %v29
  %v33 = vld [vmem:[%s1] sm:$0xff]
  %v34 = vld [vmem:[%s1 + $0x8] sm:$0xff]
  %v35 = vld [vmem:[%s1 + $0x10] sm:$0xff]
  %v36 = vld [vmem:[%s1 + $0x18] sm:$0xff]
  %v37 = vld [vmem:[%s1 + $0x20] sm:$0xff]
  %v38 = vld [vmem:[%s1 + $0x28] sm:$0xff]
  %v39 = vld [vmem:[%s1 + $0x30] sm:$0xff]
  %v40 = vld [vmem:[%s1 + $0x38] sm:$0xff]
  %v41 = vld [vmem:[%s1 + $0x40] sm:$0xff]
  %v42 = vld [vmem:[%s1 + $0x48] sm:$0xff]
  %v43 = vld [vmem:[%s1 + $0x50] sm:$0xff]
  %v44 = vld [vmem:[%s1 + $0x58] sm:$0xff]
  %v45 = vld [vmem:[%s1 + $0x60] sm:$0xff]
  %v46 = vld [vmem:[%s1 + $0x68] sm:$0xff]
  %v47 = vld [vmem:[%s1 + $0x70] sm:$0xff]
  %v48 = vld [vmem:[%s1 + $0x78] sm:$0xff]
  %v49 = vpack.c.bf16 %v34, %v33
  %v50 = vpack.c.bf16 %v36, %v35
  %v51 = vpack.c.bf16 %v38, %v37
  %v52 = vpack.c.bf16 %v40, %v39
  %v53 = vpack.c.bf16 %v42, %v41
  %v54 = vpack.c.bf16 %v44, %v43
  %v55 = vpack.c.bf16 %v46, %v45
  %v56 = vpack.c.bf16 %v48, %v47
  %57 = vmatprep.subr.bf16.mxu0 0
  %58 = vmatpush1.bf16.msra.mxu0 %v49
  %59 = vmatprep.subr.bf16.mxu0 0
  %60 = vmatpush1.bf16.msra.mxu0 %v50
  %61 = vmatprep.subr.bf16.mxu0 0
  %62 = vmatpush1.bf16.msra.mxu0 %v51
  %63 = vmatprep.subr.bf16.mxu0 0
  %64 = vmatpush1.bf16.msra.mxu0 %v52
  %65 = vmatprep.subr.bf16.mxu0 0
  %66 = vmatpush1.bf16.msra.mxu0 %v53
  %67 = vmatprep.subr.bf16.mxu0 0
  %68 = vmatpush1.bf16.msra.mxu0 %v54
  %69 = vmatprep.subr.bf16.mxu0 0
  %70 = vmatpush1.bf16.msra.mxu0 %v55
  %71 = vmatprep.subr.bf16.mxu0 0
  %72 = vmatpush1.bf16.msra.mxu0 %v56
  %73 = vmatprep.subr.bf16.mxu0 0
  %74 = vmatpush1.bf16.msra.mxu0 0
  %75 = vmatprep.subr.bf16.mxu0 0
  %76 = vmatpush1.bf16.msra.mxu0 0
  %77 = vmatprep.subr.bf16.mxu0 0
  %78 = vmatpush1.bf16.msra.mxu0 0
  %79 = vmatprep.subr.bf16.mxu0 0
  %80 = vmatpush1.bf16.msra.mxu0 0
  %81 = vmatprep.subr.bf16.mxu0 0
  %82 = vmatpush1.bf16.msra.mxu0 0
  %83 = vmatprep.subr.bf16.mxu0 0
  %84 = vmatpush1.bf16.msra.mxu0 0
  %85 = vmatprep.subr.bf16.mxu0 0
  %86 = vmatpush1.bf16.msra.mxu0 0
  %87 = vmatprep.subr.bf16.mxu0 0
  %88 = vmatpush1.bf16.msra.mxu0 0
  %89 = vmatprep.mubr.bf16.mxu0 0
  %90 = vmatmul.mubr.bf16.gmra.mrb[0].mxu0 %v31
  %v91 = vpop.f32.mrb[0].mxu0
  %v92 = vadd.f32 0.0, %v91
  %v93 = vpop.f32.mrb[0].mxu0
  %v94 = vpop.f32.mrb[0].mxu0
  %v95 = vadd.f32 0.0, %v94
  %v96 = vpop.f32.mrb[0].mxu0
  %97 = vmatprep.mubr.bf16.mxu0 0
  %98 = vmatmul.mubr.bf16.gmra.mrb[0].mxu0 %v32
  %v99 = vpop.f32.mrb[0].mxu0
  %v100 = vadd.f32 0.0, %v99
  %v101 = vpop.f32.mrb[0].mxu0
  %v102 = vpop.f32.mrb[0].mxu0
  %v103 = vadd.f32 0.0, %v102
  %v104 = vpop.f32.mrb[0].mxu0
  %105 = vdwg.mxu0
  %v106 = vadd.f32 %v23, %v92
  %v107 = vadd.f32 %v24, %v95
  %v108 = vadd.f32 %v25, %v100
  %v109 = vadd.f32 %v26, %v103
  %110 = vst [vmem:[#allocation2] sm:$0xff] %v106
  %111 = vst [vmem:[#allocation2 + $0x8] sm:$0xff] %v107
  %112 = vst [vmem:[#allocation2 + $0x10] sm:$0xff] %v108
  %113 = vst [vmem:[#allocation2 + $0x18] sm:$0xff] %v109
  // Predicated region
  $region18: #{gcn_forward.11} parent=0 // pred_check
    %p114 = pneg %p15
  $region19: #{gcn_forward.11} parent=0 // pred_check_branch
    %116 = sbr.rel (%p114) target = $region21
  $region20: #{gcn_forward.11} parent=0 // pred_region
    %v117 = vld [vmem:[#allocation2] sm:$0xff]
    %v118 = vld [vmem:[#allocation2 + $0x8] sm:$0xff]
    %v119 = vld [vmem:[#allocation2 + $0x10] sm:$0xff]
    %v120 = vld [vmem:[#allocation2 + $0x18] sm:$0xff]
    %v121 = vld [vmem:[%s2] sm:$0x1]
    %v123 = vlaneseq
    %v124 = vshrl.u32 %v123, 7
    %v125 = vsub.s32 0, %v124
    %v126 = vrot.slane %v121, %v125
    %v128 = vadd.f32 %v117, %v126
    %v129 = vadd.f32 %v118, %v126
    %v130 = vadd.f32 %v119, %v126
    %v131 = vadd.f32 %v120, %v126
    %132 = vst [vmem:[%s3] sm:$0xff] %v128
    %133 = vst [vmem:[%s3 + $0x8] sm:$0xff] %v129
    %134 = vst [vmem:[%s3 + $0x10] sm:$0xff] %v130
    %135 = vst [vmem:[%s3 + $0x18] sm:$0xff] %v131
  $region21: #{gcn_forward.11} parent=0 // pred_fallthru
    _
  // Predicated region
  $region22: #{gcn_forward.11} parent=0 // pred_check
    _
  $region23: #{gcn_forward.11} parent=0 // pred_check_branch
    %137 = sbr.rel (0) target = $region25
  $region24: #{gcn_forward.11} parent=0 // pred_region
    _
  $region25: #{gcn_forward.11} parent=0 // pred_fallthru
    _
  // Predicated region
  $region26: #{gcn_forward.11} parent=0 // pred_check
    _
  $region27: #{gcn_forward.11} parent=0 // pred_check_branch
    %139 = sbr.rel (0) target = $region29
  $region28: #{gcn_forward.11} parent=0 // pred_region
    _
  $region29: #{gcn_forward.11} parent=0 // pred_fallthru
    _

// kernel: gcn_forward.9
$region0: #{gcn_forward.9}
  #allocation0 [shape = 'u32[]', space=smem, size = 0x4, offset = 0x4, fixed_abs, tag = 'smem constant byte address 0x4 - core index']
  #allocation1 [shape = 'u32[144,128]{1,0:T(1,128)}', space=vmem, size = 0x12000, scoped, tag = 'internal scratch']
  #allocation2 [shape = 'f32[16,128]{1,0:T(8,128)}', space=vmem, size = 0x2000, scoped, tag = 'scratch operand']
  %s0 = inlined_call_operand.vmem [shape: bf16[2,16,16], index: 0, kind: input, shape index: {}]
  %s1 = inlined_call_operand.vmem [shape: f32[2,16,128], index: 1, kind: input, shape index: {}, may-alias: {1,3}]
  %s2 = inlined_call_operand.vmem [shape: f32[2,16,1], index: 2, kind: input, shape index: {}, may-alias: {2,4}]
  %s3 = inlined_call_operand.vmem [shape: f32[2,16,128], index: 3, kind: input, shape index: {}, may-alias: {1,3}]
  %s4 = inlined_call_operand.vmem [shape: f32[2,16,1], index: 4, kind: input, shape index: {}, may-alias: {2,4}]
  %s5 = inlined_call_operand.vmem [shape: f32[2,16,128], index: 5, kind: output, shape index: {}]
  %s6 = sld [smem:[#allocation0]]
  $region61: #{gcn_forward.9} parent=0
    _
  %s8 = ssub.s32 1, %s6
  %s9 = scalar_select 0, %s8, %s6
  loop: start=0, step=1, limit=4
  $region2: #{gcn_forward.9} parent=0 // loop_pre_header
    _
  $region3: #{gcn_forward.9} parent=0 // loop_header
    %s11 = sphi 0, %s15
    %p12 = scmp.ge.s32.totalorder %s11, 4
    %s18 = sphi 0, %s37
    %s19 = sphi 0, %s33
    %s20 = sphi 0, %s29
    %s21 = sphi 0, %s18
    %s22 = sphi 0, %s19
    %s23 = sphi 0, %s20
    %s24 = sphi 0, %s21
    %s25 = sphi 0, %s22
    %s26 = sphi 0, %s23
    %s44 = sphi 0, %s46
    %s47 = sphi 0, %s44
    %s48 = sphi 0, %s47
    %s64 = sphi 0, %s48
    %s72 = sphi 0, %s74
    %s75 = sphi 0, %s72
    %s76 = sphi 0, %s75
    %s92 = sphi 0, %s76
    %s100 = sphi 0, %s102
    %s103 = sphi 0, %s100
    %s104 = sphi 0, %s103
    %s120 = sphi 0, %s104
    %s128 = sphi 0, %s130
    %s131 = sphi 0, %s128
    %s132 = sphi 0, %s131
    %s148 = sphi 0, %s132
    %s156 = sphi 0, %s158
    %s159 = sphi 0, %s156
    %s160 = sphi 0, %s159
    %s176 = sphi 0, %s160
    %s184 = sphi 0, %s186
    %s187 = sphi 0, %s184
    %s188 = sphi 0, %s187
    %s204 = sphi 0, %s188
  $region4: #{gcn_forward.9} parent=0 // loop_header_branch
    %14 = sbr.rel (%p12) target = $region8
  $region5: #{gcn_forward.9} parent=0 // loop_body
    %s16 = ssub.s32 %s11, 1
    %s17 = ssub.s32 %s11, 2
    %s27 = sadd.s32 1, %s20
    %p28 = scmp.ge.s32.totalorder %s27, 1
    %s29 = scalar_select %p28, 0, %s27
    %s30 = sadd.s32 1, %s19
    %s31 = scalar_select %p28, %s30, %s19
    %p32 = scmp.ge.s32.totalorder %s31, 1
    %s33 = scalar_select %p32, 0, %s31
    %s34 = sadd.s32 1, %s18
    %s35 = scalar_select %p32, %s34, %s18
    %p36 = scmp.ge.s32.totalorder %s35, 2
    %s37 = scalar_select %p36, 0, %s35
    %s38 = ssub.s32 %s18, %s37
    %s39 = ssub.s32 %s19, %s33
    %s40 = sor.u32 %s38, %s39
    %s41 = ssub.s32 %s20, %s29
    %s42 = sor.u32 %s40, %s41
    %p43 = scmp.eq.s32.totalorder %s42, 0
    %s45 = sadd.s32 %s44, 1
    %s46 = scalar_select %p43, %s44, %s45
    %p49 = pneg %p43
    %p50 = scmp.eq.s32.totalorder %s11, 1
    %p51 = por %p49, %p50
    %p52 = scmp.ne.s32.totalorder %s44, %s47
    %p53 = scmp.eq.s32.totalorder %s11, 0
    %p54 = por %p52, %p53
    %p55 = scmp.ne.s32.totalorder %s44, %s47
    %p56 = scmp.eq.s32.totalorder %s16, 1
    %p57 = por %p55, %p56
    %p58 = scmp.ne.s32.totalorder %s47, %s48
    %p59 = scmp.eq.s32.totalorder %s16, 0
    %p60 = por %p58, %p59
    %p61 = scmp.ne.s32.totalorder %s47, %s48
    %p62 = scmp.eq.s32.totalorder %s17, 1
    %p63 = por %p61, %p62
    %p65 = scmp.ne.s32.totalorder %s48, %s64
    %p66 = scmp.eq.s32.totalorder %s17, 0
    %p67 = por %p65, %p66
    %s68 = ssub.s32 %s18, %s37
    %s69 = ssub.s32 %s20, %s29
    %s70 = sor.u32 %s68, %s69
    %p71 = scmp.eq.s32.totalorder %s70, 0
    %s73 = sadd.s32 %s72, 1
    %s74 = scalar_select %p71, %s72, %s73
    %p77 = pneg %p71
    %p78 = scmp.eq.s32.totalorder %s11, 1
    %p79 = por %p77, %p78
    %p80 = scmp.ne.s32.totalorder %s72, %s75
    %p81 = scmp.eq.s32.totalorder %s11, 0
    %p82 = por %p80, %p81
    %p83 = scmp.ne.s32.totalorder %s72, %s75
    %p84 = scmp.eq.s32.totalorder %s16, 1
    %p85 = por %p83, %p84
    %p86 = scmp.ne.s32.totalorder %s75, %s76
    %p87 = scmp.eq.s32.totalorder %s16, 0
    %p88 = por %p86, %p87
    %p89 = scmp.ne.s32.totalorder %s75, %s76
    %p90 = scmp.eq.s32.totalorder %s17, 1
    %p91 = por %p89, %p90
    %p93 = scmp.ne.s32.totalorder %s76, %s92
    %p94 = scmp.eq.s32.totalorder %s17, 0
    %p95 = por %p93, %p94
    %s96 = ssub.s32 %s18, %s37
    %s97 = ssub.s32 %s20, %s29
    %s98 = sor.u32 %s96, %s97
    %p99 = scmp.eq.s32.totalorder %s98, 0
    %s101 = sadd.s32 %s100, 1
    %s102 = scalar_select %p99, %s100, %s101
    %p105 = pneg %p99
    %p106 = scmp.eq.s32.totalorder %s11, 1
    %p107 = por %p105, %p106
    %p108 = scmp.ne.s32.totalorder %s100, %s103
    %p109 = scmp.eq.s32.totalorder %s11, 0
    %p110 = por %p108, %p109
    %p111 = scmp.ne.s32.totalorder %s100, %s103
    %p112 = scmp.eq.s32.totalorder %s16, 1
    %p113 = por %p111, %p112
    %p114 = scmp.ne.s32.totalorder %s103, %s104
    %p115 = scmp.eq.s32.totalorder %s16, 0
    %p116 = por %p114, %p115
    %p117 = scmp.ne.s32.totalorder %s103, %s104
    %p118 = scmp.eq.s32.totalorder %s17, 1
    %p119 = por %p117, %p118
    %p121 = scmp.ne.s32.totalorder %s104, %s120
    %p122 = scmp.eq.s32.totalorder %s17, 0
    %p123 = por %p121, %p122
    %s124 = ssub.s32 %s18, %s37
    %s125 = ssub.s32 %s19, %s33
    %s126 = sor.u32 %s124, %s125
    %p127 = scmp.eq.s32.totalorder %s126, 0
    %s129 = sadd.s32 %s128, 1
    %s130 = scalar_select %p127, %s128, %s129
    %p133 = pneg %p127
    %p134 = scmp.eq.s32.totalorder %s11, 1
    %p135 = por %p133, %p134
    %p136 = scmp.ne.s32.totalorder %s128, %s131
    %p137 = scmp.eq.s32.totalorder %s11, 0
    %p138 = por %p136, %p137
    %p139 = scmp.ne.s32.totalorder %s128, %s131
    %p140 = scmp.eq.s32.totalorder %s16, 1
    %p141 = por %p139, %p140
    %p142 = scmp.ne.s32.totalorder %s131, %s132
    %p143 = scmp.eq.s32.totalorder %s16, 0
    %p144 = por %p142, %p143
    %p145 = scmp.ne.s32.totalorder %s131, %s132
    %p146 = scmp.eq.s32.totalorder %s17, 1
    %p147 = por %p145, %p146
    %p149 = scmp.ne.s32.totalorder %s132, %s148
    %p150 = scmp.eq.s32.totalorder %s17, 0
    %p151 = por %p149, %p150
    %s152 = ssub.s32 %s18, %s37
    %s153 = ssub.s32 %s19, %s33
    %s154 = sor.u32 %s152, %s153
    %p155 = scmp.eq.s32.totalorder %s154, 0
    %s157 = sadd.s32 %s156, 1
    %s158 = scalar_select %p155, %s156, %s157
    %p161 = pneg %p155
    %p162 = scmp.eq.s32.totalorder %s11, 1
    %p163 = por %p161, %p162
    %p164 = scmp.ne.s32.totalorder %s156, %s159
    %p165 = scmp.eq.s32.totalorder %s11, 0
    %p166 = por %p164, %p165
    %p167 = scmp.ne.s32.totalorder %s156, %s159
    %p168 = scmp.eq.s32.totalorder %s16, 1
    %p169 = por %p167, %p168
    %p170 = scmp.ne.s32.totalorder %s159, %s160
    %p171 = scmp.eq.s32.totalorder %s16, 0
    %p172 = por %p170, %p171
    %p173 = scmp.ne.s32.totalorder %s159, %s160
    %p174 = scmp.eq.s32.totalorder %s17, 1
    %p175 = por %p173, %p174
    %p177 = scmp.ne.s32.totalorder %s160, %s176
    %p178 = scmp.eq.s32.totalorder %s17, 0
    %p179 = por %p177, %p178
    %s180 = ssub.s32 %s18, %s37
    %s181 = ssub.s32 %s19, %s33
    %s182 = sor.u32 %s180, %s181
    %p183 = scmp.eq.s32.totalorder %s182, 0
    %s185 = sadd.s32 %s184, 1
    %s186 = scalar_select %p183, %s184, %s185
    %p189 = pneg %p183
    %p190 = scmp.eq.s32.totalorder %s11, 1
    %p191 = por %p189, %p190
    %p192 = scmp.ne.s32.totalorder %s184, %s187
    %p193 = scmp.eq.s32.totalorder %s11, 0
    %p194 = por %p192, %p193
    %p195 = scmp.ne.s32.totalorder %s184, %s187
    %p196 = scmp.eq.s32.totalorder %s16, 1
    %p197 = por %p195, %p196
    %p198 = scmp.ne.s32.totalorder %s187, %s188
    %p199 = scmp.eq.s32.totalorder %s16, 0
    %p200 = por %p198, %p199
    %p201 = scmp.ne.s32.totalorder %s187, %s188
    %p202 = scmp.eq.s32.totalorder %s17, 1
    %p203 = por %p201, %p202
    %p205 = scmp.ne.s32.totalorder %s188, %s204
    %p206 = scmp.eq.s32.totalorder %s17, 0
    %p207 = por %p205, %p206
    %p208 = scmp.le.s32.totalorder 1, %s11
    %p209 = scmp.lt.s32.totalorder %s11, 3
    %p210 = pnand %p208, %p209
    %p211 = pneg %p210
    // Predicated region
    $region9: #{gcn_forward.9} parent=5 // pred_check
      _
    $region10: #{gcn_forward.9} parent=5 // pred_check_branch
      %213 = sbr.rel (%p210) target = $region12
    $region11: #{gcn_forward.9} parent=5 // pred_region
      %s214 = ssub.s32 %s11, 1
    $region12: #{gcn_forward.9} parent=5 // pred_fallthru
      _
    %p215 = scmp.lt.s32.totalorder %s11, 2
    // Predicated region
    $region13: #{gcn_forward.9} parent=5 // pred_check
      %p216 = pneg %p215
    $region14: #{gcn_forward.9} parent=5 // pred_check_branch
      %218 = sbr.rel (%p216) target = $region16
    $region15: #{gcn_forward.9} parent=5 // pred_region
      // Predicated region
      $region17: #{gcn_forward.9} parent=15 // pred_check
        %p219 = pneg %p54
      $region18: #{gcn_forward.9} parent=15 // pred_check_branch
        %221 = sbr.rel (%p219) target = $region20
      $region19: #{gcn_forward.9} parent=15 // pred_region
        %s222 = smul.u32 2, %s19
        %p223 = scmp.lt.s32.totalorder %s18, 1
        %s224 = scalar_select %p223, %s18, 1
        %p225 = scmp.lt.s32.totalorder %s222, 1
        %s226 = scalar_select %p225, %s222, 1
        %p227 = scmp.lt.s32.totalorder %s20, 0
        %s228 = scalar_select %p227, %s20, 0
        %s229 = sadd.s32 %s228, %s226
        %s230 = smul.addr %s224, 2
        %s231 = sadd.s32 %s229, %s230
        %s232 = smul.addr %s231, 4
        %s233 = scalar_lea.vmem %s0, %s232
        %s234 = smul.u32 2, %s19
      $region20: #{gcn_forward.9} parent=15 // pred_fallthru
        _
      // Predicated region
      $region21: #{gcn_forward.9} parent=15 // pred_check
        %p235 = pneg %p82
      $region22: #{gcn_forward.9} parent=15 // pred_check_branch
        %237 = sbr.rel (%p235) target = $region24
      $region23: #{gcn_forward.9} parent=15 // pred_region
        %s238 = smul.u32 2, %s20
        %p239 = scmp.lt.s32.totalorder %s18, 1
        %s240 = scalar_select %p239, %s18, 1
        %p241 = scmp.lt.s32.totalorder %s238, 1
        %s242 = scalar_select %p241, %s238, 1
        %s243 = smul.addr %s240, 2
        %s244 = sadd.s32 %s242, %s243
        %s245 = smul.addr %s244, 8
        %s246 = scalar_lea.vmem %s1, %s245
        %s247 = smul.u32 2, %s20
      $region24: #{gcn_forward.9} parent=15 // pred_fallthru
        _
      // Predicated region
      $region25: #{gcn_forward.9} parent=15 // pred_check
        %p248 = pneg %p110
      $region26: #{gcn_forward.9} parent=15 // pred_check_branch
        %250 = sbr.rel (%p248) target = $region28
      $region27: #{gcn_forward.9} parent=15 // pred_region
        %s251 = smul.u32 2, %s20
        %p252 = scmp.lt.s32.totalorder %s18, 1
        %s253 = scalar_select %p252, %s18, 1
        %p254 = scmp.lt.s32.totalorder %s251, 1
        %s255 = scalar_select %p254, %s251, 1
        %s256 = smul.addr %s253, 2
        %s257 = sadd.s32 %s255, %s256
        %s258 = smul.addr %s257, 8
        %s259 = scalar_lea.vmem %s2, %s258
        %s260 = smul.u32 2, %s20
      $region28: #{gcn_forward.9} parent=15 // pred_fallthru
        _
      // Predicated region
      $region29: #{gcn_forward.9} parent=15 // pred_check
        %p261 = pneg %p138
      $region30: #{gcn_forward.9} parent=15 // pred_check_branch
        %263 = sbr.rel (%p261) target = $region32
      $region31: #{gcn_forward.9} parent=15 // pred_region
        %s264 = smul.u32 2, %s19
        %p265 = scmp.lt.s32.totalorder %s18, 1
        %s266 = scalar_select %p265, %s18, 1
        %p267 = scmp.lt.s32.totalorder %s264, 1
        %s268 = scalar_select %p267, %s264, 1
        %s269 = smul.addr %s266, 2
        %s270 = sadd.s32 %s268, %s269
        %s271 = smul.addr %s270, 8
        %s272 = scalar_lea.vmem %s3, %s271
        %s273 = smul.u32 2, %s19
      $region32: #{gcn_forward.9} parent=15 // pred_fallthru
        _
      // Predicated region
      $region33: #{gcn_forward.9} parent=15 // pred_check
        %p274 = pneg %p166
      $region34: #{gcn_forward.9} parent=15 // pred_check_branch
        %276 = sbr.rel (%p274) target = $region36
      $region35: #{gcn_forward.9} parent=15 // pred_region
        %s277 = smul.u32 2, %s19
        %p278 = scmp.lt.s32.totalorder %s18, 1
        %s279 = scalar_select %p278, %s18, 1
        %p280 = scmp.lt.s32.totalorder %s277, 1
        %s281 = scalar_select %p280, %s277, 1
        %s282 = smul.addr %s279, 2
        %s283 = sadd.s32 %s281, %s282
        %s284 = smul.addr %s283, 8
        %s285 = scalar_lea.vmem %s4, %s284
        %s286 = smul.u32 2, %s19
      $region36: #{gcn_forward.9} parent=15 // pred_fallthru
        _
    $region16: #{gcn_forward.9} parent=5 // pred_fallthru
      _
    %p287 = scmp.le.s32.totalorder 1, %s11
    %p288 = scmp.lt.s32.totalorder %s11, 3
    %p289 = pnand %p287, %p288
    %p290 = pneg %p289
    // Predicated region
    $region37: #{gcn_forward.9} parent=5 // pred_check
      _
    $region38: #{gcn_forward.9} parent=5 // pred_check_branch
      %292 = sbr.rel (%p289) target = $region40
    $region39: #{gcn_forward.9} parent=5 // pred_region
      %s293 = ssub.s32 %s11, 1
      %s294 = smul.u32 2, %s22
      %p295 = scmp.lt.s32.totalorder %s21, 1
      %s296 = scalar_select %p295, %s21, 1
      %p297 = scmp.lt.s32.totalorder %s294, 1
      %s298 = scalar_select %p297, %s294, 1
      %p299 = scmp.lt.s32.totalorder %s23, 0
      %s300 = scalar_select %p299, %s23, 0
      %s301 = sadd.s32 %s300, %s298
      %s302 = smul.addr %s296, 2
      %s303 = sadd.s32 %s301, %s302
      %s304 = smul.addr %s303, 4
      %s305 = scalar_lea.vmem %s0, %s304
      %p306 = pneg %p60
      %p307 = pneg %p57
      %s308 = smul.u32 2, %s23
      %p309 = scmp.lt.s32.totalorder %s21, 1
      %s310 = scalar_select %p309, %s21, 1
      %p311 = scmp.lt.s32.totalorder %s308, 1
      %s312 = scalar_select %p311, %s308, 1
      %s313 = smul.addr %s310, 2
      %s314 = sadd.s32 %s312, %s313
      %s315 = smul.addr %s314, 8
      %s316 = scalar_lea.vmem %s1, %s315
      %p317 = pneg %p88
      %p318 = pneg %p85
      %s319 = smul.u32 2, %s23
      %p320 = scmp.lt.s32.totalorder %s21, 1
      %s321 = scalar_select %p320, %s21, 1
      %p322 = scmp.lt.s32.totalorder %s319, 1
      %s323 = scalar_select %p322, %s319, 1
      %s324 = smul.addr %s321, 2
      %s325 = sadd.s32 %s323, %s324
      %s326 = smul.addr %s325, 8
      %s327 = scalar_lea.vmem %s2, %s326
      %p328 = pneg %p116
      %p329 = pneg %p113
      %s330 = smul.u32 2, %s22
      %p331 = scmp.lt.s32.totalorder %s21, 1
      %s332 = scalar_select %p331, %s21, 1
      %p333 = scmp.lt.s32.totalorder %s330, 1
      %s334 = scalar_select %p333, %s330, 1
      %s335 = smul.addr %s332, 2
      %s336 = sadd.s32 %s334, %s335
      %s337 = smul.addr %s336, 8
      %s338 = scalar_lea.vmem %s3, %s337
      %p339 = pneg %p144
      %p340 = pneg %p141
      %s341 = smul.u32 2, %s22
      %p342 = scmp.lt.s32.totalorder %s21, 1
      %s343 = scalar_select %p342, %s21, 1
      %p344 = scmp.lt.s32.totalorder %s341, 1
      %s345 = scalar_select %p344, %s341, 1
      %s346 = smul.addr %s343, 2
      %s347 = sadd.s32 %s345, %s346
      %s348 = smul.addr %s347, 8
      %s349 = scalar_lea.vmem %s4, %s348
      %p350 = pneg %p172
      %p351 = pneg %p169
      %p352 = pneg %p200
      %p353 = pneg %p197
      %s354 = smul.u32 2, %s22
      %p355 = scmp.lt.s32.totalorder %s21, 1
      %s356 = scalar_select %p355, %s21, 1
      %p357 = scmp.lt.s32.totalorder %s354, 1
      %s358 = scalar_select %p357, %s354, 1
      %s359 = smul.addr %s356, 2
      %s360 = sadd.s32 %s358, %s359
      %s361 = smul.addr %s360, 8
      %s362 = scalar_lea.vmem %s5, %s361
      %s363 = smul.u32 2, %s22
      %p364 = scmp.lt.s32.totalorder %s21, 1
      %s365 = scalar_select %p364, %s21, 1
      %p366 = scmp.lt.s32.totalorder %s363, 1
      %s367 = scalar_select %p366, %s363, 1
      %p368 = scmp.lt.s32.totalorder %s23, 0
      %s369 = scalar_select %p368, %s23, 0
      %s370 = sadd.s32 %s369, %s367
      %s371 = smul.addr %s365, 2
      %s372 = sadd.s32 %s370, %s371
      %s373 = smul.addr %s372, 4
      %s374 = scalar_lea.vmem %s0, %s373
      %s375 = smul.u32 2, %s22
      %s376 = smul.u32 2, %s23
      %p377 = scmp.lt.s32.totalorder %s21, 1
      %s378 = scalar_select %p377, %s21, 1
      %p379 = scmp.lt.s32.totalorder %s376, 1
      %s380 = scalar_select %p379, %s376, 1
      %s381 = smul.addr %s378, 2
      %s382 = sadd.s32 %s380, %s381
      %s383 = smul.addr %s382, 8
      %s384 = scalar_lea.vmem %s1, %s383
      %s385 = smul.u32 2, %s23
      %s386 = smul.u32 2, %s23
      %p387 = scmp.lt.s32.totalorder %s21, 1
      %s388 = scalar_select %p387, %s21, 1
      %p389 = scmp.lt.s32.totalorder %s386, 1
      %s390 = scalar_select %p389, %s386, 1
      %s391 = smul.addr %s388, 2
      %s392 = sadd.s32 %s390, %s391
      %s393 = smul.addr %s392, 8
      %s394 = scalar_lea.vmem %s2, %s393
      %s395 = smul.u32 2, %s23
      %s396 = smul.u32 2, %s22
      %p397 = scmp.lt.s32.totalorder %s21, 1
      %s398 = scalar_select %p397, %s21, 1
      %p399 = scmp.lt.s32.totalorder %s396, 1
      %s400 = scalar_select %p399, %s396, 1
      %s401 = smul.addr %s398, 2
      %s402 = sadd.s32 %s400, %s401
      %s403 = smul.addr %s402, 8
      %s404 = scalar_lea.vmem %s3, %s403
      %s405 = smul.u32 2, %s22
      %s406 = smul.u32 2, %s22
      %p407 = scmp.lt.s32.totalorder %s21, 1
      %s408 = scalar_select %p407, %s21, 1
      %p409 = scmp.lt.s32.totalorder %s406, 1
      %s410 = scalar_select %p409, %s406, 1
      %s411 = smul.addr %s408, 2
      %s412 = sadd.s32 %s410, %s411
      %s413 = smul.addr %s412, 8
      %s414 = scalar_lea.vmem %s4, %s413
      %s415 = smul.u32 2, %s22
      %s416 = smul.u32 2, %s22
      %p417 = scmp.lt.s32.totalorder %s21, 1
      %s418 = scalar_select %p417, %s21, 1
      %p419 = scmp.lt.s32.totalorder %s416, 1
      %s420 = scalar_select %p419, %s416, 1
      %s421 = smul.addr %s418, 2
      %s422 = sadd.s32 %s420, %s421
      %s423 = smul.addr %s422, 8
      %s424 = scalar_lea.vmem %s5, %s423
      %s425 = smul.u32 2, %s22
      %p427 = scmp.eq.s32.totalorder %s23, 0
      // Predicated region
      $region41: #{gcn_forward.9} parent=39 // pred_check
        %p428 = pneg %p427
      $region42: #{gcn_forward.9} parent=39 // pred_check_branch
        %430 = sbr.rel (%p428) target = $region44
      $region43: #{gcn_forward.9} parent=39 // pred_region
        %431 = vst [vmem:[#allocation2] sm:$0xff] 0.0
        %432 = vst [vmem:[#allocation2 + $0x8] sm:$0xff] 0.0
      $region44: #{gcn_forward.9} parent=39 // pred_fallthru
        _
      %v433 = vld [vmem:[%s394] sm:$0xff]
      %v434 = vld [vmem:[%s394 + $0x8] sm:$0xff]
      %v435 = vld [vmem:[%s384] sm:$0xff]
      %v436 = vld [vmem:[%s384 + $0x8] sm:$0xff]
      %438 = vset.pattern.permute.xlu0 0
      %439 = vperm.xlu0 %438, %v433
      %v440 = vpop.permute.xlu0 %439
      %443 = vset.pattern.permute.xlu0 0
      %444 = vperm.xlu0 %443, %v434
      %v445 = vpop.permute.xlu0 %444
      %v447 = vmul.f32 %v440, %v435
      %v448 = vmul.f32 %v445, %v436
      %v449 = vpack.c.bf16 %v448, %v447
      %v450 = vld [vmem:[#allocation2] sm:$0xff]
      %v451 = vld [vmem:[#allocation2 + $0x8] sm:$0xff]
      %v452 = vld [vmem:[%s374] sm:$0xf]
      %v453 = vld [vmem:[%s374 + $0x4] sm:$0xf]
      %v456 = vunpack.c.l.b16 %v452
      %v457 = vunpack.c.l.b16 %v453
      %v458 = vpack.c.b16 %v457, %v456
      %vm459 = vcmask 130048
      %v461 = vsel %vm459, %v458, 0
      %463 = vmatprep.subr.bf16.mxu0 0
      %464 = vmatpush1.bf16.msra.mxu0 %v449
      %465 = vmatprep.subr.bf16.mxu0 0
      %466 = vmatpush1.bf16.msra.mxu0 0
      %467 = vmatprep.subr.bf16.mxu0 0
      %468 = vmatpush1.bf16.msra.mxu0 0
      %469 = vmatprep.subr.bf16.mxu0 0
      %470 = vmatpush1.bf16.msra.mxu0 0
      %471 = vmatprep.subr.bf16.mxu0 0
      %472 = vmatpush1.bf16.msra.mxu0 0
      %473 = vmatprep.subr.bf16.mxu0 0
      %474 = vmatpush1.bf16.msra.mxu0 0
      %475 = vmatprep.subr.bf16.mxu0 0
      %476 = vmatpush1.bf16.msra.mxu0 0
      %477 = vmatprep.subr.bf16.mxu0 0
      %478 = vmatpush1.bf16.msra.mxu0 0
      %479 = vmatprep.subr.bf16.mxu0 0
      %480 = vmatpush1.bf16.msra.mxu0 0
      %481 = vmatprep.subr.bf16.mxu0 0
      %482 = vmatpush1.bf16.msra.mxu0 0
      %483 = vmatprep.subr.bf16.mxu0 0
      %484 = vmatpush1.bf16.msra.mxu0 0
      %485 = vmatprep.subr.bf16.mxu0 0
      %486 = vmatpush1.bf16.msra.mxu0 0
      %487 = vmatprep.subr.bf16.mxu0 0
      %488 = vmatpush1.bf16.msra.mxu0 0
      %489 = vmatprep.subr.bf16.mxu0 0
      %490 = vmatpush1.bf16.msra.mxu0 0
      %491 = vmatprep.subr.bf16.mxu0 0
      %492 = vmatpush1.bf16.msra.mxu0 0
      %493 = vmatprep.subr.bf16.mxu0 0
      %494 = vmatpush1.bf16.msra.mxu0 0
      %495 = vmatprep.mubr.bf16.mxu0 0
      %496 = vmatmul.mubr.bf16.gmra.mrb[0].mxu0 %v461
      %v497 = vpop.f32.mrb[0].mxu0
      %v498 = vadd.f32 0.0, %v497
      %v499 = vpop.f32.mrb[0].mxu0
      %v500 = vpop.f32.mrb[0].mxu0
      %v501 = vadd.f32 0.0, %v500
      %v502 = vpop.f32.mrb[0].mxu0
      %503 = vdwg.mxu0
      %v504 = vadd.f32 %v450, %v498
      %v505 = vadd.f32 %v451, %v501
      %506 = vst [vmem:[#allocation2] sm:$0xff] %v504
      %507 = vst [vmem:[#allocation2 + $0x8] sm:$0xff] %v505
      // Predicated region
      $region45: #{gcn_forward.9} parent=39 // pred_check
        %p508 = pneg %p427
      $region46: #{gcn_forward.9} parent=39 // pred_check_branch
        %510 = sbr.rel (%p508) target = $region48
      $region47: #{gcn_forward.9} parent=39 // pred_region
        %v511 = vld [vmem:[%s404] sm:$0xff]
        %v512 = vld [vmem:[%s404 + $0x8] sm:$0xff]
        %v513 = vld [vmem:[%s414] sm:$0xff]
        %v514 = vld [vmem:[%s414 + $0x8] sm:$0xff]
        %v515 = vld [vmem:[#allocation2] sm:$0xff]
        %v516 = vld [vmem:[#allocation2 + $0x8] sm:$0xff]
        %518 = vset.pattern.permute.xlu0 0
        %519 = vperm.xlu0 %518, %v513
        %v520 = vpop.permute.xlu0 %519
        %523 = vset.pattern.permute.xlu0 0
        %524 = vperm.xlu0 %523, %v514
        %v525 = vpop.permute.xlu0 %524
        %v527 = vmul.f32 %v520, %v515
        %v528 = vmul.f32 %v525, %v516
        %v529 = vsub.f32 %v511, %v527
        %v530 = vsub.f32 %v512, %v528
        %v531 = vmax.f32 %v529, 0.0
        %v532 = vmax.f32 %v530, 0.0
        %533 = vst [vmem:[%s424] sm:$0xff] %v531
        %534 = vst [vmem:[%s424 + $0x8] sm:$0xff] %v532
      $region48: #{gcn_forward.9} parent=39 // pred_fallthru
        _
      %s535 = smul.u32 2, %s22
      %p536 = scmp.lt.s32.totalorder %s21, 1
      %s537 = scalar_select %p536, %s21, 1
      %p538 = scmp.lt.s32.totalorder %s535, 1
      %s539 = scalar_select %p538, %s535, 1
      %s540 = smul.addr %s537, 2
      %s541 = sadd.s32 %s539, %s540
      %s542 = smul.addr %s541, 8
      %s543 = scalar_lea.vmem %s5, %s542
      // Predicated region
      $region49: #{gcn_forward.9} parent=39 // pred_check
        %p544 = pneg %p197
      $region50: #{gcn_forward.9} parent=39 // pred_check_branch
        %546 = sbr.rel (%p544) target = $region52
      $region51: #{gcn_forward.9} parent=39 // pred_region
        %s547 = smul.u32 2, %s22
      $region52: #{gcn_forward.9} parent=39 // pred_fallthru
        _
    $region40: #{gcn_forward.9} parent=5 // pred_fallthru
      _
    %p548 = scmp.le.s32.totalorder 2, %s11
    // Predicated region
    $region53: #{gcn_forward.9} parent=5 // pred_check
      %p549 = pneg %p548
    $region54: #{gcn_forward.9} parent=5 // pred_check_branch
      %551 = sbr.rel (%p549) target = $region56
    $region55: #{gcn_forward.9} parent=5 // pred_region
      %s552 = ssub.s32 %s11, 2
      // Predicated region
      $region57: #{gcn_forward.9} parent=55 // pred_check
        %p553 = pneg %p203
      $region58: #{gcn_forward.9} parent=55 // pred_check_branch
        %555 = sbr.rel (%p553) target = $region60
      $region59: #{gcn_forward.9} parent=55 // pred_region
        %s556 = smul.u32 2, %s25
        %p557 = scmp.lt.s32.totalorder %s24, 1
        %s558 = scalar_select %p557, %s24, 1
        %p559 = scmp.lt.s32.totalorder %s556, 1
        %s560 = scalar_select %p559, %s556, 1
        %s561 = smul.addr %s558, 2
        %s562 = sadd.s32 %s560, %s561
        %s563 = smul.addr %s562, 8
        %s564 = scalar_lea.vmem %s5, %s563
      $region60: #{gcn_forward.9} parent=55 // pred_fallthru
        _
    $region56: #{gcn_forward.9} parent=5 // pred_fallthru
      _
  $region6: #{gcn_forward.9} parent=0 // loop_footer
    %s15 = sadd.s32 1, %s11
  $region7: #{gcn_forward.9} parent=0 // loop_footer_branch
    %10 = sbr.rel target = $region3
  $region8: #{gcn_forward.9} parent=0 // loop_exit
    _

// kernel: gcn_forward.7
$region0: #{gcn_forward.7}
  #allocation0 [shape = 'u32[]', space=smem, size = 0x4, offset = 0x4, fixed_abs, tag = 'smem constant byte address 0x4 - core index']
  #allocation1 [shape = 'u32[144,128]{1,0:T(1,128)}', space=vmem, size = 0x12000, scoped, tag = 'internal scratch']
  %s0 = inlined_call_operand.vmem [shape: f32[2,256], index: 0, kind: input, shape index: {}]
  %s1 = inlined_call_operand.vmem [shape: f32[256,128], index: 1, kind: input, shape index: {}]
  %s2 = inlined_call_operand.vmem [shape: f32[128,128], index: 2, kind: input, shape index: {}]
  %s3 = inlined_call_operand.vmem [shape: f32[1,128], index: 3, kind: input, shape index: {}]
  %s4 = inlined_call_operand.vmem [shape: f32[128,128], index: 4, kind: input, shape index: {}]
  %s5 = inlined_call_operand.vmem [shape: f32[1,128], index: 5, kind: input, shape index: {}]
  %s6 = inlined_call_operand.vmem [shape: f32[128,256], index: 6, kind: input, shape index: {}]
  %s7 = inlined_call_operand.vmem [shape: f32[128,16], index: 7, kind: input, shape index: {}]
  %s8 = inlined_call_operand.vmem [shape: bf16[2,256], index: 8, kind: output, shape index: {0}]
  %s9 = inlined_call_operand.vmem [shape: f32[2,16], index: 9, kind: output, shape index: {1}]
  %10 = xla_tuple %s8, %s9
  %s11 = sld [smem:[#allocation0]]
  $region50: #{gcn_forward.7} parent=0
    _
  %s13 = ssub.s32 1, %s11
  %s14 = scalar_select 0, %s13, %s11
  // Predicated region
  $region2: #{gcn_forward.7} parent=0 // pred_check
    _
  $region3: #{gcn_forward.7} parent=0 // pred_check_branch
    %16 = sbr.rel (0) target = $region5
  $region4: #{gcn_forward.7} parent=0 // pred_region
    _
  $region5: #{gcn_forward.7} parent=0 // pred_fallthru
    _
  // Predicated region
  $region6: #{gcn_forward.7} parent=0 // pred_check
    _
  $region7: #{gcn_forward.7} parent=0 // pred_check_branch
    %18 = sbr.rel (0) target = $region9
  $region8: #{gcn_forward.7} parent=0 // pred_region
    _
  $region9: #{gcn_forward.7} parent=0 // pred_fallthru
    _
  // Predicated region
  $region10: #{gcn_forward.7} parent=0 // pred_check
    _
  $region11: #{gcn_forward.7} parent=0 // pred_check_branch
    %20 = sbr.rel (0) target = $region13
  $region12: #{gcn_forward.7} parent=0 // pred_region
    _
  $region13: #{gcn_forward.7} parent=0 // pred_fallthru
    _
  // Predicated region
  $region14: #{gcn_forward.7} parent=0 // pred_check
    _
  $region15: #{gcn_forward.7} parent=0 // pred_check_branch
    %22 = sbr.rel (0) target = $region17
  $region16: #{gcn_forward.7} parent=0 // pred_region
    _
  $region17: #{gcn_forward.7} parent=0 // pred_fallthru
    _
  // Predicated region
  $region18: #{gcn_forward.7} parent=0 // pred_check
    _
  $region19: #{gcn_forward.7} parent=0 // pred_check_branch
    %24 = sbr.rel (0) target = $region21
  $region20: #{gcn_forward.7} parent=0 // pred_region
    _
  $region21: #{gcn_forward.7} parent=0 // pred_fallthru
    _
  // Predicated region
  $region22: #{gcn_forward.7} parent=0 // pred_check
    _
  $region23: #{gcn_forward.7} parent=0 // pred_check_branch
    %26 = sbr.rel (0) target = $region25
  $region24: #{gcn_forward.7} parent=0 // pred_region
    _
  $region25: #{gcn_forward.7} parent=0 // pred_fallthru
    _
  // Predicated region
  $region26: #{gcn_forward.7} parent=0 // pred_check
    _
  $region27: #{gcn_forward.7} parent=0 // pred_check_branch
    %28 = sbr.rel (0) target = $region29
  $region28: #{gcn_forward.7} parent=0 // pred_region
    _
  $region29: #{gcn_forward.7} parent=0 // pred_fallthru
    _
  // Predicated region
  $region30: #{gcn_forward.7} parent=0 // pred_check
    _
  $region31: #{gcn_forward.7} parent=0 // pred_check_branch
    %30 = sbr.rel (0) target = $region33
  $region32: #{gcn_forward.7} parent=0 // pred_region
    _
  $region33: #{gcn_forward.7} parent=0 // pred_fallthru
    _
  %v32 = vld [vmem:[%s0] sm:$0xf]
  %v33 = vld [vmem:[%s1] sm:$0xff]
  %v34 = vld [vmem:[%s1 + $0x8] sm:$0xff]
  %v35 = vld [vmem:[%s1 + $0x10] sm:$0xff]
  %v36 = vld [vmem:[%s1 + $0x18] sm:$0xff]
  %v37 = vld [vmem:[%s1 + $0x20] sm:$0xff]
  %v38 = vld [vmem:[%s1 + $0x28] sm:$0xff]
  %v39 = vld [vmem:[%s1 + $0x30] sm:$0xff]
  %v40 = vld [vmem:[%s1 + $0x38] sm:$0xff]
  %v41 = vld [vmem:[%s1 + $0x40] sm:$0xff]
  %v42 = vld [vmem:[%s1 + $0x48] sm:$0xff]
  %v43 = vld [vmem:[%s1 + $0x50] sm:$0xff]
  %v44 = vld [vmem:[%s1 + $0x58] sm:$0xff]
  %v45 = vld [vmem:[%s1 + $0x60] sm:$0xff]
  %v46 = vld [vmem:[%s1 + $0x68] sm:$0xff]
  %v47 = vld [vmem:[%s1 + $0x70] sm:$0xff]
  %v48 = vld [vmem:[%s1 + $0x78] sm:$0xff]
  %v49 = vld [vmem:[%s1 + $0x80] sm:$0xff]
  %v50 = vld [vmem:[%s1 + $0x88] sm:$0xff]
  %v51 = vld [vmem:[%s1 + $0x90] sm:$0xff]
  %v52 = vld [vmem:[%s1 + $0x98] sm:$0xff]
  %v53 = vld [vmem:[%s1 + $0xa0] sm:$0xff]
  %v54 = vld [vmem:[%s1 + $0xa8] sm:$0xff]
  %v55 = vld [vmem:[%s1 + $0xb0] sm:$0xff]
  %v56 = vld [vmem:[%s1 + $0xb8] sm:$0xff]
  %v57 = vld [vmem:[%s1 + $0xc0] sm:$0xff]
  %v58 = vld [vmem:[%s1 + $0xc8] sm:$0xff]
  %v59 = vld [vmem:[%s1 + $0xd0] sm:$0xff]
  %v60 = vld [vmem:[%s1 + $0xd8] sm:$0xff]
  %v61 = vld [vmem:[%s1 + $0xe0] sm:$0xff]
  %v62 = vld [vmem:[%s1 + $0xe8] sm:$0xff]
  %v63 = vld [vmem:[%s1 + $0xf0] sm:$0xff]
  %v64 = vld [vmem:[%s1 + $0xf8] sm:$0xff]
  %v67 = vunpack.c.l.s4 1983009808
  %v68 = vunpack.c.0.s8 %v67
  %v69 = vlaneseq
  %v70 = vshrl.u32 %v69, 7
  %v71 = vsub.s32 %v68, %v70
  %v72 = vrot.slane %v32, %v71
  %v73 = vcombine.high %v72, %v72
  %76 = vmatprep.subr.mxu0 0.0
  %77 = vmatpush1.msra.mxu0 %v33
  %78 = vmatprep.subr.mxu0 0.0
  %79 = vmatpush1.msra.mxu0 %v34
  %80 = vmatprep.subr.mxu0 0.0
  %81 = vmatpush1.msra.mxu0 %v35
  %82 = vmatprep.subr.mxu0 0.0
  %83 = vmatpush1.msra.mxu0 %v36
  %84 = vmatprep.subr.mxu0 0.0
  %85 = vmatpush1.msra.mxu0 %v37
  %86 = vmatprep.subr.mxu0 0.0
  %87 = vmatpush1.msra.mxu0 %v38
  %88 = vmatprep.subr.mxu0 0.0
  %89 = vmatpush1.msra.mxu0 %v39
  %90 = vmatprep.subr.mxu0 0.0
  %91 = vmatpush1.msra.mxu0 %v40
  %92 = vmatprep.subr.mxu0 0.0
  %93 = vmatpush1.msra.mxu0 %v41
  %94 = vmatprep.subr.mxu0 0.0
  %95 = vmatpush1.msra.mxu0 %v42
  %96 = vmatprep.subr.mxu0 0.0
  %97 = vmatpush1.msra.mxu0 %v43
  %98 = vmatprep.subr.mxu0 0.0
  %99 = vmatpush1.msra.mxu0 %v44
  %100 = vmatprep.subr.mxu0 0.0
  %101 = vmatpush1.msra.mxu0 %v45
  %102 = vmatprep.subr.mxu0 0.0
  %103 = vmatpush1.msra.mxu0 %v46
  %104 = vmatprep.subr.mxu0 0.0
  %105 = vmatpush1.msra.mxu0 %v47
  %106 = vmatprep.subr.mxu0 0.0
  %107 = vmatpush1.msra.mxu0 %v48
  %108 = vmatprep.subr.mxu0 0.0
  %109 = vmatpush1.msra.mxu0 %v49
  %110 = vmatprep.subr.mxu0 0.0
  %111 = vmatpush1.msra.mxu0 %v50
  %112 = vmatprep.subr.mxu0 0.0
  %113 = vmatpush1.msra.mxu0 %v51
  %114 = vmatprep.subr.mxu0 0.0
  %115 = vmatpush1.msra.mxu0 %v52
  %116 = vmatprep.subr.mxu0 0.0
  %117 = vmatpush1.msra.mxu0 %v53
  %118 = vmatprep.subr.mxu0 0.0
  %119 = vmatpush1.msra.mxu0 %v54
  %120 = vmatprep.subr.mxu0 0.0
  %121 = vmatpush1.msra.mxu0 %v55
  %122 = vmatprep.subr.mxu0 0.0
  %123 = vmatpush1.msra.mxu0 %v56
  %124 = vmatprep.subr.mxu0 0.0
  %125 = vmatpush1.msra.mxu0 %v57
  %126 = vmatprep.subr.mxu0 0.0
  %127 = vmatpush1.msra.mxu0 %v58
  %128 = vmatprep.subr.mxu0 0.0
  %129 = vmatpush1.msra.mxu0 %v59
  %130 = vmatprep.subr.mxu0 0.0
  %131 = vmatpush1.msra.mxu0 %v60
  %132 = vmatprep.subr.mxu0 0.0
  %133 = vmatpush1.msra.mxu0 %v61
  %134 = vmatprep.subr.mxu0 0.0
  %135 = vmatpush1.msra.mxu0 %v62
  %136 = vmatprep.subr.mxu0 0.0
  %137 = vmatpush1.msra.mxu0 %v63
  %138 = vmatprep.subr.mxu0 0.0
  %139 = vmatpush1.msra.mxu0 %v64
  %140 = vmatprep.mubr.f32.mxu0 %v73
  %141 = vmatmul.mubr.f32.gmra.mrb[0].mxu0 %v72
  %v142 = vpop.f32.mrb[0].mxu0
  %v143 = vadd.f32 0.0, %v142
  %v144 = vpop.f32.mrb[0].mxu0
  %145 = vdwg.mxu0
  %v146 = vpack.c.bf16 %v143, %v143
  %v147 = vld [vmem:[%s2] sm:$0xff]
  %v148 = vld [vmem:[%s2 + $0x8] sm:$0xff]
  %v149 = vld [vmem:[%s2 + $0x10] sm:$0xff]
  %v150 = vld [vmem:[%s2 + $0x18] sm:$0xff]
  %v151 = vld [vmem:[%s2 + $0x20] sm:$0xff]
  %v152 = vld [vmem:[%s2 + $0x28] sm:$0xff]
  %v153 = vld [vmem:[%s2 + $0x30] sm:$0xff]
  %v154 = vld [vmem:[%s2 + $0x38] sm:$0xff]
  %v155 = vld [vmem:[%s2 + $0x40] sm:$0xff]
  %v156 = vld [vmem:[%s2 + $0x48] sm:$0xff]
  %v157 = vld [vmem:[%s2 + $0x50] sm:$0xff]
  %v158 = vld [vmem:[%s2 + $0x58] sm:$0xff]
  %v159 = vld [vmem:[%s2 + $0x60] sm:$0xff]
  %v160 = vld [vmem:[%s2 + $0x68] sm:$0xff]
  %v161 = vld [vmem:[%s2 + $0x70] sm:$0xff]
  %v162 = vld [vmem:[%s2 + $0x78] sm:$0xff]
  %v163 = vpack.c.bf16 %v148, %v147
  %v164 = vpack.c.bf16 %v150, %v149
  %v165 = vpack.c.bf16 %v152, %v151
  %v166 = vpack.c.bf16 %v154, %v153
  %v167 = vpack.c.bf16 %v156, %v155
  %v168 = vpack.c.bf16 %v158, %v157
  %v169 = vpack.c.bf16 %v160, %v159
  %v170 = vpack.c.bf16 %v162, %v161
  %v171 = vld [vmem:[%s3] sm:$0x1]
  %v173 = vlaneseq
  %v174 = vshrl.u32 %v173, 7
  %v175 = vsub.s32 0, %v174
  %v176 = vrot.slane %v171, %v175
  %178 = vmatprep.subr.bf16.mxu0 0
  %179 = vmatpush1.bf16.msra.mxu0 %v163
  %180 = vmatprep.subr.bf16.mxu0 0
  %181 = vmatpush1.bf16.msra.mxu0 %v164
  %182 = vmatprep.subr.bf16.mxu0 0
  %183 = vmatpush1.bf16.msra.mxu0 %v165
  %184 = vmatprep.subr.bf16.mxu0 0
  %185 = vmatpush1.bf16.msra.mxu0 %v166
  %186 = vmatprep.subr.bf16.mxu0 0
  %187 = vmatpush1.bf16.msra.mxu0 %v167
  %188 = vmatprep.subr.bf16.mxu0 0
  %189 = vmatpush1.bf16.msra.mxu0 %v168
  %190 = vmatprep.subr.bf16.mxu0 0
  %191 = vmatpush1.bf16.msra.mxu0 %v169
  %192 = vmatprep.subr.bf16.mxu0 0
  %193 = vmatpush1.bf16.msra.mxu0 %v170
  %194 = vmatprep.subr.bf16.mxu0 0
  %195 = vmatpush1.bf16.msra.mxu0 0
  %196 = vmatprep.subr.bf16.mxu0 0
  %197 = vmatpush1.bf16.msra.mxu0 0
  %198 = vmatprep.subr.bf16.mxu0 0
  %199 = vmatpush1.bf16.msra.mxu0 0
  %200 = vmatprep.subr.bf16.mxu0 0
  %201 = vmatpush1.bf16.msra.mxu0 0
  %202 = vmatprep.subr.bf16.mxu0 0
  %203 = vmatpush1.bf16.msra.mxu0 0
  %204 = vmatprep.subr.bf16.mxu0 0
  %205 = vmatpush1.bf16.msra.mxu0 0
  %206 = vmatprep.subr.bf16.mxu0 0
  %207 = vmatpush1.bf16.msra.mxu0 0
  %208 = vmatprep.subr.bf16.mxu0 0
  %209 = vmatpush1.bf16.msra.mxu0 0
  %210 = vmatprep.mubr.bf16.mxu0 0
  %211 = vmatmul.mubr.bf16.gmra.mrb[0].mxu0 %v146
  %v212 = vpop.f32.mrb[0].mxu0
  %v213 = vadd.f32 %v176, %v212
  %v214 = vpop.f32.mrb[0].mxu0
  %v215 = vpop.f32.mrb[0].mxu0
  %v216 = vpop.f32.mrb[0].mxu0
  %217 = vdwg.mxu0
  %v218 = vmax.f32 %v213, 0.0
  %v219 = vpack.c.bf16 %v218, %v218
  %v220 = vld [vmem:[%s4] sm:$0xff]
  %v221 = vld [vmem:[%s4 + $0x8] sm:$0xff]
  %v222 = vld [vmem:[%s4 + $0x10] sm:$0xff]
  %v223 = vld [vmem:[%s4 + $0x18] sm:$0xff]
  %v224 = vld [vmem:[%s4 + $0x20] sm:$0xff]
  %v225 = vld [vmem:[%s4 + $0x28] sm:$0xff]
  %v226 = vld [vmem:[%s4 + $0x30] sm:$0xff]
  %v227 = vld [vmem:[%s4 + $0x38] sm:$0xff]
  %v228 = vld [vmem:[%s4 + $0x40] sm:$0xff]
  %v229 = vld [vmem:[%s4 + $0x48] sm:$0xff]
  %v230 = vld [vmem:[%s4 + $0x50] sm:$0xff]
  %v231 = vld [vmem:[%s4 + $0x58] sm:$0xff]
  %v232 = vld [vmem:[%s4 + $0x60] sm:$0xff]
  %v233 = vld [vmem:[%s4 + $0x68] sm:$0xff]
  %v234 = vld [vmem:[%s4 + $0x70] sm:$0xff]
  %v235 = vld [vmem:[%s4 + $0x78] sm:$0xff]
  %v236 = vpack.c.bf16 %v221, %v220
  %v237 = vpack.c.bf16 %v223, %v222
  %v238 = vpack.c.bf16 %v225, %v224
  %v239 = vpack.c.bf16 %v227, %v226
  %v240 = vpack.c.bf16 %v229, %v228
  %v241 = vpack.c.bf16 %v231, %v230
  %v242 = vpack.c.bf16 %v233, %v232
  %v243 = vpack.c.bf16 %v235, %v234
  %v244 = vld [vmem:[%s5] sm:$0x1]
  %v246 = vlaneseq
  %v247 = vshrl.u32 %v246, 7
  %v248 = vsub.s32 0, %v247
  %v249 = vrot.slane %v244, %v248
  %251 = vmatprep.subr.bf16.mxu0 0
  %252 = vmatpush1.bf16.msra.mxu0 %v236
  %253 = vmatprep.subr.bf16.mxu0 0
  %254 = vmatpush1.bf16.msra.mxu0 %v237
  %255 = vmatprep.subr.bf16.mxu0 0
  %256 = vmatpush1.bf16.msra.mxu0 %v238
  %257 = vmatprep.subr.bf16.mxu0 0
  %258 = vmatpush1.bf16.msra.mxu0 %v239
  %259 = vmatprep.subr.bf16.mxu0 0
  %260 = vmatpush1.bf16.msra.mxu0 %v240
  %261 = vmatprep.subr.bf16.mxu0 0
  %262 = vmatpush1.bf16.msra.mxu0 %v241
  %263 = vmatprep.subr.bf16.mxu0 0
  %264 = vmatpush1.bf16.msra.mxu0 %v242
  %265 = vmatprep.subr.bf16.mxu0 0
  %266 = vmatpush1.bf16.msra.mxu0 %v243
  %267 = vmatprep.subr.bf16.mxu0 0
  %268 = vmatpush1.bf16.msra.mxu0 0
  %269 = vmatprep.subr.bf16.mxu0 0
  %270 = vmatpush1.bf16.msra.mxu0 0
  %271 = vmatprep.subr.bf16.mxu0 0
  %272 = vmatpush1.bf16.msra.mxu0 0
  %273 = vmatprep.subr.bf16.mxu0 0
  %274 = vmatpush1.bf16.msra.mxu0 0
  %275 = vmatprep.subr.bf16.mxu0 0
  %276 = vmatpush1.bf16.msra.mxu0 0
  %277 = vmatprep.subr.bf16.mxu0 0
  %278 = vmatpush1.bf16.msra.mxu0 0
  %279 = vmatprep.subr.bf16.mxu0 0
  %280 = vmatpush1.bf16.msra.mxu0 0
  %281 = vmatprep.subr.bf16.mxu0 0
  %282 = vmatpush1.bf16.msra.mxu0 0
  %283 = vmatprep.mubr.bf16.mxu0 0
  %284 = vmatmul.mubr.bf16.gmra.mrb[0].mxu0 %v219
  %v285 = vpop.f32.mrb[0].mxu0
  %v286 = vadd.f32 %v249, %v285
  %v287 = vpop.f32.mrb[0].mxu0
  %v288 = vpop.f32.mrb[0].mxu0
  %v289 = vpop.f32.mrb[0].mxu0
  %290 = vdwg.mxu0
  %v291 = vxor.u32 %v286, 2147483648
  %v292 = vmul.f32 %v291, 1.442695
  %v293 = vpow.pop %v292
  %v294 = vadd.f32 %v293, 1.0
  %v295 = vrcp.pop %v294
  %v296 = vmul.f32 1.0, %v295
  %v297 = vld [vmem:[%s6] sm:$0xff]
  %v298 = vld [vmem:[%s6 + $0x8] sm:$0xff]
  %v299 = vld [vmem:[%s6 + $0x10] sm:$0xff]
  %v300 = vld [vmem:[%s6 + $0x18] sm:$0xff]
  %v301 = vld [vmem:[%s6 + $0x20] sm:$0xff]
  %v302 = vld [vmem:[%s6 + $0x28] sm:$0xff]
  %v303 = vld [vmem:[%s6 + $0x30] sm:$0xff]
  %v304 = vld [vmem:[%s6 + $0x38] sm:$0xff]
  %v305 = vld [vmem:[%s6 + $0x40] sm:$0xff]
  %v306 = vld [vmem:[%s6 + $0x48] sm:$0xff]
  %v307 = vld [vmem:[%s6 + $0x50] sm:$0xff]
  %v308 = vld [vmem:[%s6 + $0x58] sm:$0xff]
  %v309 = vld [vmem:[%s6 + $0x60] sm:$0xff]
  %v310 = vld [vmem:[%s6 + $0x68] sm:$0xff]
  %v311 = vld [vmem:[%s6 + $0x70] sm:$0xff]
  %v312 = vld [vmem:[%s6 + $0x78] sm:$0xff]
  %v313 = vld [vmem:[%s6 + $0x80] sm:$0xff]
  %v314 = vld [vmem:[%s6 + $0x88] sm:$0xff]
  %v315 = vld [vmem:[%s6 + $0x90] sm:$0xff]
  %v316 = vld [vmem:[%s6 + $0x98] sm:$0xff]
  %v317 = vld [vmem:[%s6 + $0xa0] sm:$0xff]
  %v318 = vld [vmem:[%s6 + $0xa8] sm:$0xff]
  %v319 = vld [vmem:[%s6 + $0xb0] sm:$0xff]
  %v320 = vld [vmem:[%s6 + $0xb8] sm:$0xff]
  %v321 = vld [vmem:[%s6 + $0xc0] sm:$0xff]
  %v322 = vld [vmem:[%s6 + $0xc8] sm:$0xff]
  %v323 = vld [vmem:[%s6 + $0xd0] sm:$0xff]
  %v324 = vld [vmem:[%s6 + $0xd8] sm:$0xff]
  %v325 = vld [vmem:[%s6 + $0xe0] sm:$0xff]
  %v326 = vld [vmem:[%s6 + $0xe8] sm:$0xff]
  %v327 = vld [vmem:[%s6 + $0xf0] sm:$0xff]
  %v328 = vld [vmem:[%s6 + $0xf8] sm:$0xff]
  %329 = vmatprep.subr.mxu0 %v298
  %330 = vmatpush1.msra.mxu0 %v297
  %331 = vmatprep.subr.mxu0 %v300
  %332 = vmatpush1.msra.mxu0 %v299
  %333 = vmatprep.subr.mxu0 %v302
  %334 = vmatpush1.msra.mxu0 %v301
  %335 = vmatprep.subr.mxu0 %v304
  %336 = vmatpush1.msra.mxu0 %v303
  %337 = vmatprep.subr.mxu0 %v306
  %338 = vmatpush1.msra.mxu0 %v305
  %339 = vmatprep.subr.mxu0 %v308
  %340 = vmatpush1.msra.mxu0 %v307
  %341 = vmatprep.subr.mxu0 %v310
  %342 = vmatpush1.msra.mxu0 %v309
  %343 = vmatprep.subr.mxu0 %v312
  %344 = vmatpush1.msra.mxu0 %v311
  %345 = vmatprep.subr.mxu0 %v314
  %346 = vmatpush1.msra.mxu0 %v313
  %347 = vmatprep.subr.mxu0 %v316
  %348 = vmatpush1.msra.mxu0 %v315
  %349 = vmatprep.subr.mxu0 %v318
  %350 = vmatpush1.msra.mxu0 %v317
  %351 = vmatprep.subr.mxu0 %v320
  %352 = vmatpush1.msra.mxu0 %v319
  %353 = vmatprep.subr.mxu0 %v322
  %354 = vmatpush1.msra.mxu0 %v321
  %355 = vmatprep.subr.mxu0 %v324
  %356 = vmatpush1.msra.mxu0 %v323
  %357 = vmatprep.subr.mxu0 %v326
  %358 = vmatpush1.msra.mxu0 %v325
  %359 = vmatprep.subr.mxu0 %v328
  %360 = vmatpush1.msra.mxu0 %v327
  %361 = vmatprep.subr.mxu0 0.0
  %362 = vmatpush1.msra.mxu0 0.0
  %363 = vmatprep.subr.mxu0 0.0
  %364 = vmatpush1.msra.mxu0 0.0
  %365 = vmatprep.subr.mxu0 0.0
  %366 = vmatpush1.msra.mxu0 0.0
  %367 = vmatprep.subr.mxu0 0.0
  %368 = vmatpush1.msra.mxu0 0.0
  %369 = vmatprep.subr.mxu0 0.0
  %370 = vmatpush1.msra.mxu0 0.0
  %371 = vmatprep.subr.mxu0 0.0
  %372 = vmatpush1.msra.mxu0 0.0
  %373 = vmatprep.subr.mxu0 0.0
  %374 = vmatpush1.msra.mxu0 0.0
  %375 = vmatprep.subr.mxu0 0.0
  %376 = vmatpush1.msra.mxu0 0.0
  %377 = vmatprep.subr.mxu0 0.0
  %378 = vmatpush1.msra.mxu0 0.0
  %379 = vmatprep.subr.mxu0 0.0
  %380 = vmatpush1.msra.mxu0 0.0
  %381 = vmatprep.subr.mxu0 0.0
  %382 = vmatpush1.msra.mxu0 0.0
  %383 = vmatprep.subr.mxu0 0.0
  %384 = vmatpush1.msra.mxu0 0.0
  %385 = vmatprep.subr.mxu0 0.0
  %386 = vmatpush1.msra.mxu0 0.0
  %387 = vmatprep.subr.mxu0 0.0
  %388 = vmatpush1.msra.mxu0 0.0
  %389 = vmatprep.subr.mxu0 0.0
  %390 = vmatpush1.msra.mxu0 0.0
  %391 = vmatprep.subr.mxu0 0.0
  %392 = vmatpush1.msra.mxu0 0.0
  %393 = vmatprep.mubr.f32.mxu0 0.0
  %394 = vmatmul.mubr.f32.gmra.mrb[0].mxu0 %v296
  %v395 = vpop.f32.mrb[0].mxu0
  %v396 = vadd.f32 0.0, %v395
  %v397 = vpop.f32.mrb[0].mxu0
  %v398 = vadd.f32 0.0, %v397
  %399 = vdwg.mxu0
  %v400 = vpack.c.bf16 %v396, %v396
  %v401 = vpack.c.bf16 %v398, %v398
  %v404 = vcombine.low %v400, %v401
  %v406 = vunpack.c.l.s4 1966171168
  %v407 = vunpack.c.0.s8 %v406
  %v408 = vlaneseq
  %v409 = vshrl.u32 %v408, 7
  %v410 = vsub.s32 %v407, %v409
  %v411 = vrot.slane %v404, %v410
  %v413 = vunpack.c.l.s4 1966171168
  %v414 = vunpack.c.0.s8 %v413
  %v415 = vlaneseq
  %v416 = vshrl.u32 %v415, 7
  %v417 = vsub.s32 %v414, %v416
  %v418 = vrot.slane %v411, %v417
  %420 = vst [vmem:[%s8] sm:$0x3] %v418
  %v421 = vld [vmem:[%s7] sm:$0xff]
  %v422 = vld [vmem:[%s7 + $0x8] sm:$0xff]
  %v423 = vld [vmem:[%s7 + $0x10] sm:$0xff]
  %v424 = vld [vmem:[%s7 + $0x18] sm:$0xff]
  %v425 = vld [vmem:[%s7 + $0x20] sm:$0xff]
  %v426 = vld [vmem:[%s7 + $0x28] sm:$0xff]
  %v427 = vld [vmem:[%s7 + $0x30] sm:$0xff]
  %v428 = vld [vmem:[%s7 + $0x38] sm:$0xff]
  %v429 = vld [vmem:[%s7 + $0x40] sm:$0xff]
  %v430 = vld [vmem:[%s7 + $0x48] sm:$0xff]
  %v431 = vld [vmem:[%s7 + $0x50] sm:$0xff]
  %v432 = vld [vmem:[%s7 + $0x58] sm:$0xff]
  %v433 = vld [vmem:[%s7 + $0x60] sm:$0xff]
  %v434 = vld [vmem:[%s7 + $0x68] sm:$0xff]
  %v435 = vld [vmem:[%s7 + $0x70] sm:$0xff]
  %v436 = vld [vmem:[%s7 + $0x78] sm:$0xff]
  %437 = vmatprep.subr.mxu0 0.0
  %438 = vmatpush1.msra.mxu0 %v421
  %439 = vmatprep.subr.mxu0 0.0
  %440 = vmatpush1.msra.mxu0 %v422
  %441 = vmatprep.subr.mxu0 0.0
  %442 = vmatpush1.msra.mxu0 %v423
  %443 = vmatprep.subr.mxu0 0.0
  %444 = vmatpush1.msra.mxu0 %v424
  %445 = vmatprep.subr.mxu0 0.0
  %446 = vmatpush1.msra.mxu0 %v425
  %447 = vmatprep.subr.mxu0 0.0
  %448 = vmatpush1.msra.mxu0 %v426
  %449 = vmatprep.subr.mxu0 0.0
  %450 = vmatpush1.msra.mxu0 %v427
  %451 = vmatprep.subr.mxu0 0.0
  %452 = vmatpush1.msra.mxu0 %v428
  %453 = vmatprep.subr.mxu0 0.0
  %454 = vmatpush1.msra.mxu0 %v429
  %455 = vmatprep.subr.mxu0 0.0
  %456 = vmatpush1.msra.mxu0 %v430
  %457 = vmatprep.subr.mxu0 0.0
  %458 = vmatpush1.msra.mxu0 %v431
  %459 = vmatprep.subr.mxu0 0.0
  %460 = vmatpush1.msra.mxu0 %v432
  %461 = vmatprep.subr.mxu0 0.0
  %462 = vmatpush1.msra.mxu0 %v433
  %463 = vmatprep.subr.mxu0 0.0
  %464 = vmatpush1.msra.mxu0 %v434
  %465 = vmatprep.subr.mxu0 0.0
  %466 = vmatpush1.msra.mxu0 %v435
  %467 = vmatprep.subr.mxu0 0.0
  %468 = vmatpush1.msra.mxu0 %v436
  %469 = vmatprep.subr.mxu0 0.0
  %470 = vmatpush1.msra.mxu0 0.0
  %471 = vmatprep.subr.mxu0 0.0
  %472 = vmatpush1.msra.mxu0 0.0
  %473 = vmatprep.subr.mxu0 0.0
  %474 = vmatpush1.msra.mxu0 0.0
  %475 = vmatprep.subr.mxu0 0.0
  %476 = vmatpush1.msra.mxu0 0.0
  %477 = vmatprep.subr.mxu0 0.0
  %478 = vmatpush1.msra.mxu0 0.0
  %479 = vmatprep.subr.mxu0 0.0
  %480 = vmatpush1.msra.mxu0 0.0
  %481 = vmatprep.subr.mxu0 0.0
  %482 = vmatpush1.msra.mxu0 0.0
  %483 = vmatprep.subr.mxu0 0.0
  %484 = vmatpush1.msra.mxu0 0.0
  %485 = vmatprep.subr.mxu0 0.0
  %486 = vmatpush1.msra.mxu0 0.0
  %487 = vmatprep.subr.mxu0 0.0
  %488 = vmatpush1.msra.mxu0 0.0
  %489 = vmatprep.subr.mxu0 0.0
  %490 = vmatpush1.msra.mxu0 0.0
  %491 = vmatprep.subr.mxu0 0.0
  %492 = vmatpush1.msra.mxu0 0.0
  %493 = vmatprep.subr.mxu0 0.0
  %494 = vmatpush1.msra.mxu0 0.0
  %495 = vmatprep.subr.mxu0 0.0
  %496 = vmatpush1.msra.mxu0 0.0
  %497 = vmatprep.subr.mxu0 0.0
  %498 = vmatpush1.msra.mxu0 0.0
  %499 = vmatprep.subr.mxu0 0.0
  %500 = vmatpush1.msra.mxu0 0.0
  %501 = vmatprep.mubr.f32.mxu0 0.0
  %502 = vmatmul.mubr.f32.gmra.mrb[0].mxu0 %v296
  %v503 = vpop.f32.mrb[0].mxu0
  %v504 = vadd.f32 0.0, %v503
  %v505 = vpop.f32.mrb[0].mxu0
  %506 = vdwg.mxu0
  %vm507 = vcmp.gt.f32.partialorder %v504, 0.0
  %v508 = vrsqrt.pop %v504
  %v509 = vsel %vm507, %v508, 0.0
  %vm510 = vcmask 123904
  %511 = vst.msk [vmem:[%s9] sm:$0x3] %vm510, %v509
  // Predicated region
  $region34: #{gcn_forward.7} parent=0 // pred_check
    _
  $region35: #{gcn_forward.7} parent=0 // pred_check_branch
    %513 = sbr.rel (0) target = $region37
  $region36: #{gcn_forward.7} parent=0 // pred_region
    _
  $region37: #{gcn_forward.7} parent=0 // pred_fallthru
    _
  // Predicated region
  $region38: #{gcn_forward.7} parent=0 // pred_check
    _
  $region39: #{gcn_forward.7} parent=0 // pred_check_branch
    %515 = sbr.rel (0) target = $region41
  $region40: #{gcn_forward.7} parent=0 // pred_region
    _
  $region41: #{gcn_forward.7} parent=0 // pred_fallthru
    _
  // Predicated region
  $region42: #{gcn_forward.7} parent=0 // pred_check
    _
  $region43: #{gcn_forward.7} parent=0 // pred_check_branch
    %517 = sbr.rel (0) target = $region45
  $region44: #{gcn_forward.7} parent=0 // pred_region
    _
  $region45: #{gcn_forward.7} parent=0 // pred_fallthru
    _
  // Predicated region
  $region46: #{gcn_forward.7} parent=0 // pred_check
    _
  $region47: #{gcn_forward.7} parent=0 // pred_check_branch
    %519 = sbr.rel (0) target = $region49
  $region48: #{gcn_forward.7} parent=0 // pred_region
    _
  $region49: #{gcn_forward.7} parent=0 // pred_fallthru
    _

// kernel: gcn_forward.13
$region0: #{gcn_forward.13}
  #allocation0 [shape = 'u32[]', space=smem, size = 0x4, offset = 0x4, fixed_abs, tag = 'smem constant byte address 0x4 - core index']
  #allocation1 [shape = 'u32[144,128]{1,0:T(1,128)}', space=vmem, size = 0x12000, scoped, tag = 'internal scratch']
  #allocation2 [shape = 'f32[2,128]{1,0:T(2,128)}', space=vmem, size = 0x400, scoped, tag = 'scratch operand']
  %s0 = inlined_call_operand.vmem [shape: f32[2,2048], index: 0, kind: input, shape index: {}]
  %s1 = inlined_call_operand.vmem [shape: f32[2048,128], index: 1, kind: input, shape index: {}]
  %s2 = inlined_call_operand.vmem [shape: f32[1,128], index: 2, kind: input, shape index: {}]
  %s3 = inlined_call_operand.hbm [shape: f32[2,128], index: 3, kind: output, shape index: {}]
  %s4 = sld [smem:[#allocation0]]
  $region53: #{gcn_forward.13} parent=0
    _
  %s6 = ssub.s32 1, %s4
  %s7 = scalar_select 0, %s6, %s4
  $region1: #{gcn_forward.13} parent=0
    #allocation3 [shape = 'u8[1024]{0}', space=vmem, size = 0x400, scoped, tag = 'output window, operand 0, single buffered']
    #allocation4 [shape = 's32[2]{0}', space=sflag, size = 0x8, scoped, tag = 'scoped memory for gcn_forward.13']
    %8 = vsyncpa [#allocation4], 0
    loop: start=0, step=1, limit=6
    $region2: #{gcn_forward.13} parent=1 // loop_pre_header
      _
    $region3: #{gcn_forward.13} parent=1 // loop_header
      %s10 = sphi 0, %s14
      %p11 = scmp.ge.s32.totalorder %s10, 6
      %s17 = sphi 0, %s36
      %s18 = sphi 0, %s32
      %s19 = sphi 0, %s28
      %s20 = sphi 0, %s17
      %s21 = sphi 0, %s18
      %s22 = sphi 0, %s19
      %s23 = sphi 0, %s20
      %s24 = sphi 0, %s21
      %s25 = sphi 0, %s22
      %s41 = sphi 0, %s43
      %s44 = sphi 0, %s41
      %s45 = sphi 0, %s44
      %s61 = sphi 0, %s45
      %s69 = sphi 0, %s71
      %s72 = sphi 0, %s69
      %s73 = sphi 0, %s72
      %s89 = sphi 0, %s73
      %s95 = sphi 0, %s97
      %s98 = sphi 0, %s95
      %s99 = sphi 0, %s98
      %s115 = sphi 0, %s99
      %s123 = sphi 0, %s125
      %s126 = sphi 0, %s123
      %s127 = sphi 0, %s126
      %s143 = sphi 0, %s127
    $region4: #{gcn_forward.13} parent=1 // loop_header_branch
      %13 = sbr.rel (%p11) target = $region8
    $region5: #{gcn_forward.13} parent=1 // loop_body
      %s15 = ssub.s32 %s10, 1
      %s16 = ssub.s32 %s10, 2
      %s26 = sadd.s32 1, %s19
      %p27 = scmp.ge.s32.totalorder %s26, 4
      %s28 = scalar_select %p27, 0, %s26
      %s29 = sadd.s32 1, %s18
      %s30 = scalar_select %p27, %s29, %s18
      %p31 = scmp.ge.s32.totalorder %s30, 1
      %s32 = scalar_select %p31, 0, %s30
      %s33 = sadd.s32 1, %s17
      %s34 = scalar_select %p31, %s33, %s17
      %p35 = scmp.ge.s32.totalorder %s34, 1
      %s36 = scalar_select %p35, 0, %s34
      %s37 = ssub.s32 %s17, %s36
      %s38 = ssub.s32 %s19, %s28
      %s39 = sor.u32 %s37, %s38
      %p40 = scmp.eq.s32.totalorder %s39, 0
      %s42 = sadd.s32 %s41, 1
      %s43 = scalar_select %p40, %s41, %s42
      %p46 = pneg %p40
      %p47 = scmp.eq.s32.totalorder %s10, 3
      %p48 = por %p46, %p47
      %p49 = scmp.ne.s32.totalorder %s41, %s44
      %p50 = scmp.eq.s32.totalorder %s10, 0
      %p51 = por %p49, %p50
      %p52 = scmp.ne.s32.totalorder %s41, %s44
      %p53 = scmp.eq.s32.totalorder %s15, 3
      %p54 = por %p52, %p53
      %p55 = scmp.ne.s32.totalorder %s44, %s45
      %p56 = scmp.eq.s32.totalorder %s15, 0
      %p57 = por %p55, %p56
      %p58 = scmp.ne.s32.totalorder %s44, %s45
      %p59 = scmp.eq.s32.totalorder %s16, 3
      %p60 = por %p58, %p59
      %p62 = scmp.ne.s32.totalorder %s45, %s61
      %p63 = scmp.eq.s32.totalorder %s16, 0
      %p64 = por %p62, %p63
      %s65 = ssub.s32 %s19, %s28
      %s66 = ssub.s32 %s18, %s32
      %s67 = sor.u32 %s65, %s66
      %p68 = scmp.eq.s32.totalorder %s67, 0
      %s70 = sadd.s32 %s69, 1
      %s71 = scalar_select %p68, %s69, %s70
      %p74 = pneg %p68
      %p75 = scmp.eq.s32.totalorder %s10, 3
      %p76 = por %p74, %p75
      %p77 = scmp.ne.s32.totalorder %s69, %s72
      %p78 = scmp.eq.s32.totalorder %s10, 0
      %p79 = por %p77, %p78
      %p80 = scmp.ne.s32.totalorder %s69, %s72
      %p81 = scmp.eq.s32.totalorder %s15, 3
      %p82 = por %p80, %p81
      %p83 = scmp.ne.s32.totalorder %s72, %s73
      %p84 = scmp.eq.s32.totalorder %s15, 0
      %p85 = por %p83, %p84
      %p86 = scmp.ne.s32.totalorder %s72, %s73
      %p87 = scmp.eq.s32.totalorder %s16, 3
      %p88 = por %p86, %p87
      %p90 = scmp.ne.s32.totalorder %s73, %s89
      %p91 = scmp.eq.s32.totalorder %s16, 0
      %p92 = por %p90, %p91
      %s93 = ssub.s32 %s18, %s32
      %p94 = scmp.eq.s32.totalorder %s93, 0
      %s96 = sadd.s32 %s95, 1
      %s97 = scalar_select %p94, %s95, %s96
      %p100 = pneg %p94
      %p101 = scmp.eq.s32.totalorder %s10, 3
      %p102 = por %p100, %p101
      %p103 = scmp.ne.s32.totalorder %s95, %s98
      %p104 = scmp.eq.s32.totalorder %s10, 0
      %p105 = por %p103, %p104
      %p106 = scmp.ne.s32.totalorder %s95, %s98
      %p107 = scmp.eq.s32.totalorder %s15, 3
      %p108 = por %p106, %p107
      %p109 = scmp.ne.s32.totalorder %s98, %s99
      %p110 = scmp.eq.s32.totalorder %s15, 0
      %p111 = por %p109, %p110
      %p112 = scmp.ne.s32.totalorder %s98, %s99
      %p113 = scmp.eq.s32.totalorder %s16, 3
      %p114 = por %p112, %p113
      %p116 = scmp.ne.s32.totalorder %s99, %s115
      %p117 = scmp.eq.s32.totalorder %s16, 0
      %p118 = por %p116, %p117
      %s119 = ssub.s32 %s17, %s36
      %s120 = ssub.s32 %s18, %s32
      %s121 = sor.u32 %s119, %s120
      %p122 = scmp.eq.s32.totalorder %s121, 0
      %s124 = sadd.s32 %s123, 1
      %s125 = scalar_select %p122, %s123, %s124
      %p128 = pneg %p122
      %p129 = scmp.eq.s32.totalorder %s10, 3
      %p130 = por %p128, %p129
      %p131 = scmp.ne.s32.totalorder %s123, %s126
      %p132 = scmp.eq.s32.totalorder %s10, 0
      %p133 = por %p131, %p132
      %p134 = scmp.ne.s32.totalorder %s123, %s126
      %p135 = scmp.eq.s32.totalorder %s15, 3
      %p136 = por %p134, %p135
      %p137 = scmp.ne.s32.totalorder %s126, %s127
      %p138 = scmp.eq.s32.totalorder %s15, 0
      %p139 = por %p137, %p138
      %p140 = scmp.ne.s32.totalorder %s126, %s127
      %p141 = scmp.eq.s32.totalorder %s16, 3
      %p142 = por %p140, %p141
      %p144 = scmp.ne.s32.totalorder %s127, %s143
      %p145 = scmp.eq.s32.totalorder %s16, 0
      %p146 = por %p144, %p145
      %p147 = scmp.le.s32.totalorder 1, %s10
      %p148 = scmp.lt.s32.totalorder %s10, 5
      %p149 = pnand %p147, %p148
      %p150 = pneg %p149
      // Predicated region
      $region9: #{gcn_forward.13} parent=5 // pred_check
        _
      $region10: #{gcn_forward.13} parent=5 // pred_check_branch
        %152 = sbr.rel (%p149) target = $region12
      $region11: #{gcn_forward.13} parent=5 // pred_region
        %s153 = ssub.s32 %s10, 1
        // Predicated region
        $region13: #{gcn_forward.13} parent=11 // pred_check
          %p154 = pneg %p111
        $region14: #{gcn_forward.13} parent=11 // pred_check_branch
          %156 = sbr.rel (%p154) target = $region16
        $region15: #{gcn_forward.13} parent=11 // pred_region
          %p157 = scmp.lt.s32.totalorder %s21, 0
          %s158 = scalar_select %p157, %s21, 0
          %s159 = scalar_lea.vmem %s2, %s158
        $region16: #{gcn_forward.13} parent=11 // pred_fallthru
          _
      $region12: #{gcn_forward.13} parent=5 // pred_fallthru
        _
      %p160 = scmp.lt.s32.totalorder %s10, 4
      // Predicated region
      $region17: #{gcn_forward.13} parent=5 // pred_check
        %p161 = pneg %p160
      $region18: #{gcn_forward.13} parent=5 // pred_check_branch
        %163 = sbr.rel (%p161) target = $region20
      $region19: #{gcn_forward.13} parent=5 // pred_region
        // Predicated region
        $region21: #{gcn_forward.13} parent=19 // pred_check
          %p164 = pneg %p51
        $region22: #{gcn_forward.13} parent=19 // pred_check_branch
          %166 = sbr.rel (%p164) target = $region24
        $region23: #{gcn_forward.13} parent=19 // pred_region
          %s167 = smul.u32 4, %s19
          %p168 = scmp.lt.s32.totalorder %s17, 0
          %s169 = scalar_select %p168, %s17, 0
          %p170 = scmp.lt.s32.totalorder %s167, 15
          %s171 = scalar_select %p170, %s167, 15
          %s172 = smul.addr %s169, 16
          %s173 = sadd.s32 %s171, %s172
          %s174 = smul.addr %s173, 2
          %s175 = scalar_lea.vmem %s0, %s174
          %s176 = smul.u32 4, %s19
        $region24: #{gcn_forward.13} parent=19 // pred_fallthru
          _
        // Predicated region
        $region25: #{gcn_forward.13} parent=19 // pred_check
          %p177 = pneg %p79
        $region26: #{gcn_forward.13} parent=19 // pred_check_branch
          %179 = sbr.rel (%p177) target = $region28
        $region27: #{gcn_forward.13} parent=19 // pred_region
          %s180 = smul.u32 64, %s19
          %p181 = scmp.lt.s32.totalorder %s180, 255
          %s182 = scalar_select %p181, %s180, 255
          %p183 = scmp.lt.s32.totalorder %s18, 0
          %s184 = scalar_select %p183, %s18, 0
          %s185 = sadd.s32 %s184, %s182
          %s186 = smul.addr %s185, 8
          %s187 = scalar_lea.vmem %s1, %s186
          %s188 = smul.u32 64, %s19
        $region28: #{gcn_forward.13} parent=19 // pred_fallthru
          _
      $region20: #{gcn_forward.13} parent=5 // pred_fallthru
        _
      %p189 = scmp.le.s32.totalorder 1, %s10
      %p190 = scmp.lt.s32.totalorder %s10, 5
      %p191 = pnand %p189, %p190
      %p192 = pneg %p191
      // Predicated region
      $region29: #{gcn_forward.13} parent=5 // pred_check
        _
      $region30: #{gcn_forward.13} parent=5 // pred_check_branch
        %194 = sbr.rel (%p191) target = $region32
      $region31: #{gcn_forward.13} parent=5 // pred_region
        %s195 = ssub.s32 %s10, 1
        %s196 = smul.u32 4, %s22
        %p197 = scmp.lt.s32.totalorder %s20, 0
        %s198 = scalar_select %p197, %s20, 0
        %p199 = scmp.lt.s32.totalorder %s196, 15
        %s200 = scalar_select %p199, %s196, 15
        %s201 = smul.addr %s198, 16
        %s202 = sadd.s32 %s200, %s201
        %s203 = smul.addr %s202, 2
        %s204 = scalar_lea.vmem %s0, %s203
        %p205 = pneg %p57
        %p206 = pneg %p54
        %s207 = smul.u32 64, %s22
        %p208 = scmp.lt.s32.totalorder %s207, 255
        %s209 = scalar_select %p208, %s207, 255
        %p210 = scmp.lt.s32.totalorder %s21, 0
        %s211 = scalar_select %p210, %s21, 0
        %s212 = sadd.s32 %s211, %s209
        %s213 = smul.addr %s212, 8
        %s214 = scalar_lea.vmem %s1, %s213
        %p215 = pneg %p85
        %p216 = pneg %p82
        %p217 = scmp.lt.s32.totalorder %s21, 0
        %s218 = scalar_select %p217, %s21, 0
        %s219 = scalar_lea.vmem %s2, %s218
        %p220 = pneg %p111
        %p221 = pneg %p108
        %p222 = pneg %p139
        %p223 = pneg %p136
        %s224 = smul.u32 4, %s22
        %p225 = scmp.lt.s32.totalorder %s20, 0
        %s226 = scalar_select %p225, %s20, 0
        %p227 = scmp.lt.s32.totalorder %s224, 15
        %s228 = scalar_select %p227, %s224, 15
        %s229 = smul.addr %s226, 16
        %s230 = sadd.s32 %s228, %s229
        %s231 = smul.addr %s230, 2
        %s232 = scalar_lea.vmem %s0, %s231
        %s233 = smul.u32 4, %s22
        %s234 = smul.u32 64, %s22
        %p235 = scmp.lt.s32.totalorder %s234, 255
        %s236 = scalar_select %p235, %s234, 255
        %p237 = scmp.lt.s32.totalorder %s21, 0
        %s238 = scalar_select %p237, %s21, 0
        %s239 = sadd.s32 %s238, %s236
        %s240 = smul.addr %s239, 8
        %s241 = scalar_lea.vmem %s1, %s240
        %s242 = smul.u32 64, %s22
        %p243 = scmp.lt.s32.totalorder %s21, 0
        %s244 = scalar_select %p243, %s21, 0
        %s245 = scalar_lea.vmem %s2, %s244
        %p247 = scmp.eq.s32.totalorder %s22, 0
        // Predicated region
        $region33: #{gcn_forward.13} parent=31 // pred_check
          %p248 = pneg %p247
        $region34: #{gcn_forward.13} parent=31 // pred_check_branch
          %250 = sbr.rel (%p248) target = $region36
        $region35: #{gcn_forward.13} parent=31 // pred_region
          %251 = vst [vmem:[#allocation2] sm:$0x3] 0.0
        $region36: #{gcn_forward.13} parent=31 // pred_fallthru
          _
        %v252 = vld [vmem:[#allocation2] sm:$0x3]
        %v253 = vld [vmem:[%s232] sm:$0xff]
        %v255 = vcombine.high %v253, %v253
        %v257 = vunpack.c.l.s4 1983009808
        %v258 = vunpack.c.0.s8 %v257
        %v259 = vlaneseq
        %v260 = vshrl.u32 %v259, 7
        %v261 = vsub.s32 %v258, %v260
        %v262 = vrot.slane %v253, %v261
        %v264 = vunpack.c.l.s4 1983009808
        %v265 = vunpack.c.0.s8 %v264
        %v266 = vlaneseq
        %v267 = vshrl.u32 %v266, 7
        %v268 = vsub.s32 %v265, %v267
        %v269 = vrot.slane %v255, %v268
        %v270 = vcombine.high %v262, %v262
        %v271 = vcombine.high %v269, %v269
        %v276 = vpack.c.bf16 %v262, %v262
        %v277 = vpack.c.bf16 %v270, %v270
        %v278 = vpack.c.bf16 %v269, %v269
        %v279 = vpack.c.bf16 %v271, %v271
        %v280 = vld [vmem:[%s241] sm:$0xff]
        %v281 = vld [vmem:[%s241 + $0x8] sm:$0xff]
        %v282 = vld [vmem:[%s241 + $0x10] sm:$0xff]
        %v283 = vld [vmem:[%s241 + $0x18] sm:$0xff]
        %v284 = vld [vmem:[%s241 + $0x20] sm:$0xff]
        %v285 = vld [vmem:[%s241 + $0x28] sm:$0xff]
        %v286 = vld [vmem:[%s241 + $0x30] sm:$0xff]
        %v287 = vld [vmem:[%s241 + $0x38] sm:$0xff]
        %v288 = vld [vmem:[%s241 + $0x40] sm:$0xff]
        %v289 = vld [vmem:[%s241 + $0x48] sm:$0xff]
        %v290 = vld [vmem:[%s241 + $0x50] sm:$0xff]
        %v291 = vld [vmem:[%s241 + $0x58] sm:$0xff]
        %v292 = vld [vmem:[%s241 + $0x60] sm:$0xff]
        %v293 = vld [vmem:[%s241 + $0x68] sm:$0xff]
        %v294 = vld [vmem:[%s241 + $0x70] sm:$0xff]
        %v295 = vld [vmem:[%s241 + $0x78] sm:$0xff]
        %v296 = vld [vmem:[%s241 + $0x80] sm:$0xff]
        %v297 = vld [vmem:[%s241 + $0x88] sm:$0xff]
        %v298 = vld [vmem:[%s241 + $0x90] sm:$0xff]
        %v299 = vld [vmem:[%s241 + $0x98] sm:$0xff]
        %v300 = vld [vmem:[%s241 + $0xa0] sm:$0xff]
        %v301 = vld [vmem:[%s241 + $0xa8] sm:$0xff]
        %v302 = vld [vmem:[%s241 + $0xb0] sm:$0xff]
        %v303 = vld [vmem:[%s241 + $0xb8] sm:$0xff]
        %v304 = vld [vmem:[%s241 + $0xc0] sm:$0xff]
        %v305 = vld [vmem:[%s241 + $0xc8] sm:$0xff]
        %v306 = vld [vmem:[%s241 + $0xd0] sm:$0xff]
        %v307 = vld [vmem:[%s241 + $0xd8] sm:$0xff]
        %v308 = vld [vmem:[%s241 + $0xe0] sm:$0xff]
        %v309 = vld [vmem:[%s241 + $0xe8] sm:$0xff]
        %v310 = vld [vmem:[%s241 + $0xf0] sm:$0xff]
        %v311 = vld [vmem:[%s241 + $0xf8] sm:$0xff]
        %v312 = vld [vmem:[%s241 + $0x100] sm:$0xff]
        %v313 = vld [vmem:[%s241 + $0x108] sm:$0xff]
        %v314 = vld [vmem:[%s241 + $0x110] sm:$0xff]
        %v315 = vld [vmem:[%s241 + $0x118] sm:$0xff]
        %v316 = vld [vmem:[%s241 + $0x120] sm:$0xff]
        %v317 = vld [vmem:[%s241 + $0x128] sm:$0xff]
        %v318 = vld [vmem:[%s241 + $0x130] sm:$0xff]
        %v319 = vld [vmem:[%s241 + $0x138] sm:$0xff]
        %v320 = vld [vmem:[%s241 + $0x140] sm:$0xff]
        %v321 = vld [vmem:[%s241 + $0x148] sm:$0xff]
        %v322 = vld [vmem:[%s241 + $0x150] sm:$0xff]
        %v323 = vld [vmem:[%s241 + $0x158] sm:$0xff]
        %v324 = vld [vmem:[%s241 + $0x160] sm:$0xff]
        %v325 = vld [vmem:[%s241 + $0x168] sm:$0xff]
        %v326 = vld [vmem:[%s241 + $0x170] sm:$0xff]
        %v327 = vld [vmem:[%s241 + $0x178] sm:$0xff]
        %v328 = vld [vmem:[%s241 + $0x180] sm:$0xff]
        %v329 = vld [vmem:[%s241 + $0x188] sm:$0xff]
        %v330 = vld [vmem:[%s241 + $0x190] sm:$0xff]
        %v331 = vld [vmem:[%s241 + $0x198] sm:$0xff]
        %v332 = vld [vmem:[%s241 + $0x1a0] sm:$0xff]
        %v333 = vld [vmem:[%s241 + $0x1a8] sm:$0xff]
        %v334 = vld [vmem:[%s241 + $0x1b0] sm:$0xff]
        %v335 = vld [vmem:[%s241 + $0x1b8] sm:$0xff]
        %v336 = vld [vmem:[%s241 + $0x1c0] sm:$0xff]
        %v337 = vld [vmem:[%s241 + $0x1c8] sm:$0xff]
        %v338 = vld [vmem:[%s241 + $0x1d0] sm:$0xff]
        %v339 = vld [vmem:[%s241 + $0x1d8] sm:$0xff]
        %v340 = vld [vmem:[%s241 + $0x1e0] sm:$0xff]
        %v341 = vld [vmem:[%s241 + $0x1e8] sm:$0xff]
        %v342 = vld [vmem:[%s241 + $0x1f0] sm:$0xff]
        %v343 = vld [vmem:[%s241 + $0x1f8] sm:$0xff]
        %v344 = vpack.c.bf16 %v281, %v280
        %v345 = vpack.c.bf16 %v283, %v282
        %v346 = vpack.c.bf16 %v285, %v284
        %v347 = vpack.c.bf16 %v287, %v286
        %v348 = vpack.c.bf16 %v289, %v288
        %v349 = vpack.c.bf16 %v291, %v290
        %v350 = vpack.c.bf16 %v293, %v292
        %v351 = vpack.c.bf16 %v295, %v294
        %v352 = vpack.c.bf16 %v297, %v296
        %v353 = vpack.c.bf16 %v299, %v298
        %v354 = vpack.c.bf16 %v301, %v300
        %v355 = vpack.c.bf16 %v303, %v302
        %v356 = vpack.c.bf16 %v305, %v304
        %v357 = vpack.c.bf16 %v307, %v306
        %v358 = vpack.c.bf16 %v309, %v308
        %v359 = vpack.c.bf16 %v311, %v310
        %v360 = vpack.c.bf16 %v313, %v312
        %v361 = vpack.c.bf16 %v315, %v314
        %v362 = vpack.c.bf16 %v317, %v316
        %v363 = vpack.c.bf16 %v319, %v318
        %v364 = vpack.c.bf16 %v321, %v320
        %v365 = vpack.c.bf16 %v323, %v322
        %v366 = vpack.c.bf16 %v325, %v324
        %v367 = vpack.c.bf16 %v327, %v326
        %v368 = vpack.c.bf16 %v329, %v328
        %v369 = vpack.c.bf16 %v331, %v330
        %v370 = vpack.c.bf16 %v333, %v332
        %v371 = vpack.c.bf16 %v335, %v334
        %v372 = vpack.c.bf16 %v337, %v336
        %v373 = vpack.c.bf16 %v339, %v338
        %v374 = vpack.c.bf16 %v341, %v340
        %v375 = vpack.c.bf16 %v343, %v342
        %376 = vmatprep.subr.bf16.mxu0 0
        %377 = vmatpush1.bf16.msra.mxu0 %v344
        %378 = vmatprep.subr.bf16.mxu0 0
        %379 = vmatpush1.bf16.msra.mxu0 %v345
        %380 = vmatprep.subr.bf16.mxu0 0
        %381 = vmatpush1.bf16.msra.mxu0 %v346
        %382 = vmatprep.subr.bf16.mxu0 0
        %383 = vmatpush1.bf16.msra.mxu0 %v347
        %384 = vmatprep.subr.bf16.mxu0 0
        %385 = vmatpush1.bf16.msra.mxu0 %v348
        %386 = vmatprep.subr.bf16.mxu0 0
        %387 = vmatpush1.bf16.msra.mxu0 %v349
        %388 = vmatprep.subr.bf16.mxu0 0
        %389 = vmatpush1.bf16.msra.mxu0 %v350
        %390 = vmatprep.subr.bf16.mxu0 0
        %391 = vmatpush1.bf16.msra.mxu0 %v351
        %392 = vmatprep.subr.bf16.mxu0 0
        %393 = vmatpush1.bf16.msra.mxu0 %v352
        %394 = vmatprep.subr.bf16.mxu0 0
        %395 = vmatpush1.bf16.msra.mxu0 %v353
        %396 = vmatprep.subr.bf16.mxu0 0
        %397 = vmatpush1.bf16.msra.mxu0 %v354
        %398 = vmatprep.subr.bf16.mxu0 0
        %399 = vmatpush1.bf16.msra.mxu0 %v355
        %400 = vmatprep.subr.bf16.mxu0 0
        %401 = vmatpush1.bf16.msra.mxu0 %v356
        %402 = vmatprep.subr.bf16.mxu0 0
        %403 = vmatpush1.bf16.msra.mxu0 %v357
        %404 = vmatprep.subr.bf16.mxu0 0
        %405 = vmatpush1.bf16.msra.mxu0 %v358
        %406 = vmatprep.subr.bf16.mxu0 0
        %407 = vmatpush1.bf16.msra.mxu0 %v359
        %408 = vmatprep.mubr.bf16.mxu0 %v277
        %409 = vmatmul.mubr.bf16.gmra.mrb[0].mxu0 %v276
        %v410 = vpop.f32.mrb[0].mxu0
        %v411 = vadd.f32 0.0, %v410
        %v412 = vpop.f32.mrb[0].mxu0
        %v413 = vpop.f32.mrb[0].mxu0
        %v414 = vpop.f32.mrb[0].mxu0
        %415 = vdwg.mxu0
        %416 = vmatprep.subr.bf16.mxu0 0
        %417 = vmatpush1.bf16.msra.mxu0 %v360
        %418 = vmatprep.subr.bf16.mxu0 0
        %419 = vmatpush1.bf16.msra.mxu0 %v361
        %420 = vmatprep.subr.bf16.mxu0 0
        %421 = vmatpush1.bf16.msra.mxu0 %v362
        %422 = vmatprep.subr.bf16.mxu0 0
        %423 = vmatpush1.bf16.msra.mxu0 %v363
        %424 = vmatprep.subr.bf16.mxu0 0
        %425 = vmatpush1.bf16.msra.mxu0 %v364
        %426 = vmatprep.subr.bf16.mxu0 0
        %427 = vmatpush1.bf16.msra.mxu0 %v365
        %428 = vmatprep.subr.bf16.mxu0 0
        %429 = vmatpush1.bf16.msra.mxu0 %v366
        %430 = vmatprep.subr.bf16.mxu0 0
        %431 = vmatpush1.bf16.msra.mxu0 %v367
        %432 = vmatprep.subr.bf16.mxu0 0
        %433 = vmatpush1.bf16.msra.mxu0 %v368
        %434 = vmatprep.subr.bf16.mxu0 0
        %435 = vmatpush1.bf16.msra.mxu0 %v369
        %436 = vmatprep.subr.bf16.mxu0 0
        %437 = vmatpush1.bf16.msra.mxu0 %v370
        %438 = vmatprep.subr.bf16.mxu0 0
        %439 = vmatpush1.bf16.msra.mxu0 %v371
        %440 = vmatprep.subr.bf16.mxu0 0
        %441 = vmatpush1.bf16.msra.mxu0 %v372
        %442 = vmatprep.subr.bf16.mxu0 0
        %443 = vmatpush1.bf16.msra.mxu0 %v373
        %444 = vmatprep.subr.bf16.mxu0 0
        %445 = vmatpush1.bf16.msra.mxu0 %v374
        %446 = vmatprep.subr.bf16.mxu0 0
        %447 = vmatpush1.bf16.msra.mxu0 %v375
        %448 = vmatprep.mubr.bf16.mxu0 %v279
        %449 = vmatmul.mubr.bf16.gmra.mrb[0].mxu0 %v278
        %v450 = vpop.f32.mrb[0].mxu0
        %v451 = vadd.f32 %v411, %v450
        %v452 = vpop.f32.mrb[0].mxu0
        %v453 = vpop.f32.mrb[0].mxu0
        %v454 = vpop.f32.mrb[0].mxu0
        %455 = vdwg.mxu0
        %v456 = vadd.f32 %v252, %v451
        %457 = vst [vmem:[#allocation2] sm:$0x3] %v456
        %p458 = scmp.eq.s32.totalorder %s22, 3
        // Predicated region
        $region37: #{gcn_forward.13} parent=31 // pred_check
          %p459 = pneg %p458
        $region38: #{gcn_forward.13} parent=31 // pred_check_branch
          %461 = sbr.rel (%p459) target = $region40
        $region39: #{gcn_forward.13} parent=31 // pred_region
          %v462 = vld [vmem:[#allocation2] sm:$0x3]
          %v463 = vld [vmem:[%s245] sm:$0x1]
          %v465 = vlaneseq
          %v466 = vshrl.u32 %v465, 7
          %v467 = vsub.s32 0, %v466
          %v468 = vrot.slane %v463, %v467
          %v470 = vadd.f32 %v462, %v468
          %471 = vst [vmem:[#allocation3] sm:$0x3] %v470
        $region40: #{gcn_forward.13} parent=31 // pred_fallthru
          _
        // Predicated region
        $region41: #{gcn_forward.13} parent=31 // pred_check
          %p472 = pneg %p136
        $region42: #{gcn_forward.13} parent=31 // pred_check_branch
          %474 = sbr.rel (%p472) target = $region44
        $region43: #{gcn_forward.13} parent=31 // pred_region
          %s476 = ssub.s32 32, 32
          %477 = vsyncadd [#allocation4], %s476
          %s478 = sadd.s32 %s21, %s20
          %s479 = smul.addr %s478, 32
          %s480 = scalar_lea.hbm %s3, %s479
          %s482 = sshll.u32 [#allocation3], 4
          %s483 = int_to_ptr.vmem [resolvable:$true] %s482
          %485 = dma.vmem_to_hbm [thread:$0]  %s483, 32, %s480, [#allocation4]
        $region44: #{gcn_forward.13} parent=31 // pred_fallthru
          _
        // Predicated region
        $region45: #{gcn_forward.13} parent=31 // pred_check
          %p486 = pneg %p136
        $region46: #{gcn_forward.13} parent=31 // pred_check_branch
          %488 = sbr.rel (%p486) target = $region48
        $region47: #{gcn_forward.13} parent=31 // pred_region
          %489 = dma.done [#allocation4], 32
        $region48: #{gcn_forward.13} parent=31 // pred_fallthru
          _
      $region32: #{gcn_forward.13} parent=5 // pred_fallthru
        _
      %p490 = scmp.le.s32.totalorder 2, %s10
      // Predicated region
      $region49: #{gcn_forward.13} parent=5 // pred_check
        %p491 = pneg %p490
      $region50: #{gcn_forward.13} parent=5 // pred_check_branch
        %493 = sbr.rel (%p491) target = $region52
      $region51: #{gcn_forward.13} parent=5 // pred_region
        %s494 = ssub.s32 %s10, 2
      $region52: #{gcn_forward.13} parent=5 // pred_fallthru
        _
    $region6: #{gcn_forward.13} parent=1 // loop_footer
      %s14 = sadd.s32 1, %s10
    $region7: #{gcn_forward.13} parent=1 // loop_footer_branch
      %9 = sbr.rel target = $region3
    $region8: #{gcn_forward.13} parent=1 // loop_exit
      _
    %495 = vsyncpa [#allocation4], 1
    %s496 = scalar_lea.sflag [#allocation4], 1
    %497 = vsyncpa %s496, 1

</llo_original>
